<compile_context>
chip_gen: v5e
topology: v5e:2x2
jax: 0.10.0
libtpu: 0.0.40
codegen_flags: <defaults>
</compile_context>

<pallas_src>
import jax
import jax.numpy as jnp
from jax.experimental import pallas as pl
from jax.experimental.pallas import tpu as pltpu

BN_EPS = 1e-5    # torch.nn.BatchNorm1d default eps
L2_EPS = 1e-12   # torch.nn.functional.normalize default eps

_VMEM = pltpu.MemorySpace.VMEM
_MXU_ROWS = 256          # v6e/v7x MXU rows (multiple of v5e's 128)
_MAX_TILE_N = 2048
_MAX_TILE_K = 2048
_VMEM_FALLBACK = 64 << 20  # v7x per-TensorCore VMEM: conservative lower bound

_vmem_cap_cache = None


def _round_up(x, m):
    return ((x + m - 1) // m) * m


def _cdiv(a, b):
    return (a + b - 1) // b


def _vmem_capacity_bytes():
    global _vmem_cap_cache
    if _vmem_cap_cache is None:
        try:
            cap = int(pltpu.get_tpu_info().vmem_capacity_bytes)
        except Exception:  # pragma: no cover - conservative fallback
            cap = _VMEM_FALLBACK
        _vmem_cap_cache = cap if cap > 0 else _VMEM_FALLBACK
    return _vmem_cap_cache


def _vmem_budget():
    cap = _vmem_capacity_bytes()
    # ~108 MiB on v5e/v6e (128 MiB physical), ~48 MiB on v7x (64 MiB per TC).
    return max(32 << 20, min(cap - (16 << 20), int(0.85 * cap)))


def _compiler_params(block_bytes, dims):
    need = int(block_bytes) + (4 << 20)
    limit = int(min(max(need, 32 << 20), _vmem_budget()))
    return pltpu.CompilerParams(dimension_semantics=dims,
                                vmem_limit_bytes=limit)


def _choose_tiles(n, fp, mp, kp):
    """Pick (tile_n, tile_k, kt, kp_pad, n_pad) from the VMEM budget."""
    budget = _vmem_budget() - (8 << 20)        # scheduling headroom

    # K tiling: bound the per-step (tile_k, fp) weight slab and per-row image
    # bytes; this is what keeps pass 1 inside v7x's 64 MiB VMEM for wide K.
    kt = max(1, _cdiv(kp, _MAX_TILE_K))
    tile_k = _round_up(_cdiv(kp, kt), 128)
    kp_pad = kt * tile_k

    # Pass-1 VMEM: double-buffered img/bbw/w1/h tiles + f32 feature accumulator.
    fixed = 2 * (tile_k * fp * 2) + 2 * (fp * mp * 2) + 2 * (2 * mp * 4)
    per_row = 2 * (tile_k * 2) + 2 * (mp * 2) + fp * 4
    rows_budget = max(16, (budget - fixed) // per_row)

    align = _MXU_ROWS if n >= 2 * _MXU_ROWS else 16   # 16: bf16 sublane pack
    cap = max(align, min(_MAX_TILE_N, (rows_budget // align) * align))
    tile_n = min(_round_up(n, align), cap)
    # Prefer multiple batch tiles: >=2 always (v7x has two TensorCores), and
    # >=4 as long as tiles stay large enough to keep DMA/pipeline efficiency.
    while tile_n > align and (
            _cdiv(n, tile_n) < 2 or (_cdiv(n, tile_n) < 4 and tile_n > 512)):
        tile_n = max(align, _round_up(tile_n // 2, align))
    n_pad = _round_up(n, tile_n)
    return tile_n, tile_k, kt, kp_pad, n_pad


# ----------------------------- kernels --------------------------------------


def _stage1_kernel(img_ref, bbw_ref, w1_ref, h_ref, stats_ref, acc_ref):
    """K-tiled backbone projection + Linear1 -> h (bf16) + BN1 partial stats."""
    k = pl.program_id(1)

    @pl.when(k == 0)
    def _():
        acc_ref[...] = jnp.zeros_like(acc_ref)

    acc_ref[...] += jnp.dot(img_ref[...], bbw_ref[...],
                            preferred_element_type=jnp.float32)

    @pl.when(k == pl.num_programs(1) - 1)
    def _():
        h = jnp.dot(acc_ref[...].astype(jnp.bfloat16), w1_ref[...],
                    preferred_element_type=jnp.float32)
        # Store h as bf16 (halves pass-2 HBM traffic); stats come from f32 h.
        h_ref[...] = h.astype(jnp.bfloat16)
        s = jnp.sum(h, axis=0, keepdims=True)
        q = jnp.sum(h * h, axis=0, keepdims=True)
        stats_ref[...] = jnp.concatenate([s, q], axis=0)[None]
        # Zero-padded batch rows produce exactly-zero h rows, so no masking is
        # needed for the BN1 partial sums.


def _make_stage2_kernel(tile_n, n_true):
    def kernel(h_ref, sc1_ref, sh1_ref, w2_ref, y_ref, stats_ref):
        """BN1 (scale/shift) + ReLU + Linear2 -> y (bf16) + BN2 partial stats."""
        a = jnp.maximum(
            h_ref[...].astype(jnp.float32) * sc1_ref[...] + sh1_ref[...], 0.0)
        y = jnp.dot(a.astype(jnp.bfloat16), w2_ref[...],
                    preferred_element_type=jnp.float32)
        # Zero padded batch rows so they pollute neither the BN2 statistics nor
        # the (discarded) output rows.
        rows = (pl.program_id(0) * tile_n
                + jax.lax.broadcasted_iota(jnp.int32, y.shape, 0))
        y = jnp.where(rows < n_true, y, 0.0)
        y_ref[...] = y.astype(jnp.bfloat16)
        s = jnp.sum(y, axis=0, keepdims=True)
        q = jnp.sum(y * y, axis=0, keepdims=True)
        stats_ref[...] = jnp.concatenate([s, q], axis=0)[None]
    return kernel


def _stage3_kernel(y_ref, sc2_ref, sh2_ref, o_ref):
    """BN2 (affine=False) + row-wise L2 normalize (lane-dense output slab)."""
    z = y_ref[...].astype(jnp.float32) * sc2_ref[...] + sh2_ref[...]
    nsq = jnp.sum(z * z, axis=-1, keepdims=True)
    # F.normalize: x / max(||x||, eps) == x * rsqrt(max(||x||^2, eps^2))  (EUP)
    o_ref[...] = z * jax.lax.rsqrt(jnp.maximum(nsq, L2_EPS * L2_EPS))


# ----------------------------- wrapper ---------------------------------------


def mlp_probe_forward(images, backbone_w, w1, gamma1, beta1, w2, *, tile_n=None):
    """MLPProbe forward.

    images:       (N, C, H, W)
    backbone_w:   (C*H*W, feat_dim)   frozen stand-in backbone projection
    w1:           (feat_dim, mlp_dim) Linear(bias=False)
    gamma1,beta1: (mlp_dim,)          BatchNorm1d affine params
    w2:           (mlp_dim, out_dim)  Linear(bias=False)
    returns:      (N, out_dim) rows L2-normalized
    """
    n = images.shape[0]
    img = jnp.reshape(images, (n, -1))
    kdim = img.shape[1]
    f, m = w1.shape
    o = w2.shape[1]

    kp = _round_up(kdim, 128)
    fp = _round_up(f, 128)
    mp = _round_up(m, 128)
    op = _round_up(o, 128)

    tn, tile_k, kt, kp_pad, n_pad = _choose_tiles(n, fp, mp, kp)
    if tile_n is not None:                       # manual override (multiple of 16)
        tn = _round_up(int(tile_n), 16)
        n_pad = _round_up(n, tn)
    nt = n_pad // tn

    # .float().detach(): forward values unchanged; block gradients into backbone.
    bbw = jax.lax.stop_gradient(backbone_w)

    # bf16 matmul operands, zero-padded to 128-lane widths / tile multiples.
    # Padded feature columns stay exactly zero through both BN layers, so the
    # row L2 norm is unaffected; padded batch rows are masked out of BN stats.
    img_b = jnp.pad(img.astype(jnp.bfloat16),
                    ((0, n_pad - n), (0, kp_pad - kdim)))
    bbw_b = jnp.pad(bbw.astype(jnp.bfloat16), ((0, kp_pad - kdim), (0, fp - f)))
    w1_b = jnp.pad(w1.astype(jnp.bfloat16), ((0, fp - f), (0, mp - m)))
    w2_b = jnp.pad(w2.astype(jnp.bfloat16), ((0, mp - m), (0, op - o)))
    g1 = jnp.pad(gamma1.astype(jnp.float32), (0, mp - m))
    b1 = jnp.pad(beta1.astype(jnp.float32), (0, mp - m))

    nf = jnp.float32(n)   # true batch size for BN divisors

    # ---- pass 1: backbone projection (K-tiled) + Linear1 + BN1 partials -----
    blk1 = (2 * tn * tile_k * 2 + 2 * tile_k * fp * 2 + 2 * fp * mp * 2
            + 2 * tn * mp * 2 + tn * fp * 4 + 4 * mp * 4)
    h, stats1 = pl.pallas_call(
        _stage1_kernel,
        grid=(nt, kt),
        in_specs=[
            pl.BlockSpec((tn, tile_k), lambda i, k: (i, k), memory_space=_VMEM),
            pl.BlockSpec((tile_k, fp), lambda i, k: (k, 0), memory_space=_VMEM),
            pl.BlockSpec((fp, mp), lambda i, k: (0, 0), memory_space=_VMEM),
        ],
        out_specs=[
            pl.BlockSpec((tn, mp), lambda i, k: (i, 0), memory_space=_VMEM),
            pl.BlockSpec((1, 2, mp), lambda i, k: (i, 0, 0), memory_space=_VMEM),
        ],
        out_shape=[
            jax.ShapeDtypeStruct((n_pad, mp), jnp.bfloat16),
            jax.ShapeDtypeStruct((nt, 2, mp), jnp.float32),
        ],
        scratch_shapes=[pltpu.VMEM((tn, fp), jnp.float32)],
        compiler_params=_compiler_params(blk1, ("parallel", "arbitrary")),
        cost_estimate=pl.CostEstimate(
            flops=2 * n_pad * (kp_pad * fp + fp * mp),
            transcendentals=0,
            bytes_accessed=(n_pad * kp_pad * 2 + kp_pad * fp * 2 + fp * mp * 2
                            + n_pad * mp * 2 + nt * 2 * mp * 4),
        ),
    )(img_b, bbw_b, w1_b)

    # BN1 full-batch stats from merged per-tile partials (tiny glue).
    sums1 = jnp.sum(stats1, axis=0)                       # (2, mp)
    mean1 = sums1[0] / nf
    var1 = jnp.maximum(sums1[1] / nf - mean1 * mean1, 0.0)  # biased, clamped
    inv1 = jax.lax.rsqrt(var1 + BN_EPS)
    scale1 = (g1 * inv1).reshape(1, mp)
    shift1 = (b1 - mean1 * g1 * inv1).reshape(1, mp)

    # ---- pass 2: BN1 + ReLU + Linear2 + BN2 partials --------------------------
    blk2 = (2 * tn * mp * 2 + 2 * mp * 4 + 2 * mp * op * 2
            + 2 * tn * op * 2 + 4 * op * 4)
    y, stats2 = pl.pallas_call(
        _make_stage2_kernel(tn, n),
        grid=(nt,),
        in_specs=[
            pl.BlockSpec((tn, mp), lambda i: (i, 0), memory_space=_VMEM),
            pl.BlockSpec((1, mp), lambda i: (0, 0), memory_space=_VMEM),
            pl.BlockSpec((1, mp), lambda i: (0, 0), memory_space=_VMEM),
            pl.BlockSpec((mp, op), lambda i: (0, 0), memory_space=_VMEM),
        ],
        out_specs=[
            pl.BlockSpec((tn, op), lambda i: (i, 0), memory_space=_VMEM),
            pl.BlockSpec((1, 2, op), lambda i: (i, 0, 0), memory_space=_VMEM),
        ],
        out_shape=[
            jax.ShapeDtypeStruct((n_pad, op), jnp.bfloat16),
            jax.ShapeDtypeStruct((nt, 2, op), jnp.float32),
        ],
        compiler_params=_compiler_params(blk2, ("parallel",)),
        cost_estimate=pl.CostEstimate(
            flops=2 * n_pad * mp * op + 6 * n_pad * mp,
            transcendentals=0,
            bytes_accessed=(n_pad * mp * 2 + 2 * mp * 4 + mp * op * 2
                            + n_pad * op * 2 + nt * 2 * op * 4),
        ),
    )(h, scale1, shift1, w2_b)

    # BN2 (affine=False) full-batch stats.
    sums2 = jnp.sum(stats2, axis=0)
    mean2 = sums2[0] / nf
    var2 = jnp.maximum(sums2[1] / nf - mean2 * mean2, 0.0)
    inv2 = jax.lax.rsqrt(var2 + BN_EPS)
    scale2 = inv2.reshape(1, op)
    shift2 = (-mean2 * inv2).reshape(1, op)

    # ---- pass 3: BN2 + L2 normalize ------------------------------------------
    blk3 = 2 * tn * op * 2 + 2 * tn * op * 4 + 2 * op * 4
    out_pad = pl.pallas_call(
        _stage3_kernel,
        grid=(nt,),
        in_specs=[
            pl.BlockSpec((tn, op), lambda i: (i, 0), memory_space=_VMEM),
            pl.BlockSpec((1, op), lambda i: (0, 0), memory_space=_VMEM),
            pl.BlockSpec((1, op), lambda i: (0, 0), memory_space=_VMEM),
        ],
        out_specs=pl.BlockSpec((tn, op), lambda i: (i, 0), memory_space=_VMEM),
        out_shape=jax.ShapeDtypeStruct((n_pad, op), jnp.float32),
        compiler_params=_compiler_params(blk3, ("parallel",)),
        cost_estimate=pl.CostEstimate(
            flops=5 * n_pad * op,
            transcendentals=n_pad,
            bytes_accessed=n_pad * op * 2 + n_pad * op * 4 + 2 * op * 4,
        ),
    )(y, scale2, shift2)

    # Padded columns are exactly zero and padded rows are discarded, so slicing
    # back to the true shape preserves the per-row L2 norm.
    return out_pad[:n, :o]


# ----------------------------- reference & demo ------------------------------


def _reference_forward(images, backbone_w, w1, gamma1, beta1, w2):
    """Pure-jnp reference mirroring the kernel's bf16-matmul / bf16-activation
    / f32-BN choices (BN stats from f32, applied to bf16-rounded activations)."""
    n = images.shape[0]
    x = images.reshape(n, -1)
    feats = jnp.dot(x.astype(jnp.bfloat16), backbone_w.astype(jnp.bfloat16),
                    preferred_element_type=jnp.float32)
    h = jnp.dot(feats.astype(jnp.bfloat16), w1.astype(jnp.bfloat16),
                preferred_element_type=jnp.float32)
    mean1, var1 = h.mean(axis=0), h.var(axis=0)
    inv1 = jax.lax.rsqrt(var1 + BN_EPS)
    h16 = h.astype(jnp.bfloat16).astype(jnp.float32)
    a = jnp.maximum((h16 - mean1) * inv1 * gamma1 + beta1, 0.0)
    y = jnp.dot(a.astype(jnp.bfloat16), w2.astype(jnp.bfloat16),
                preferred_element_type=jnp.float32)
    mean2, var2 = y.mean(axis=0), y.var(axis=0)
    inv2 = jax.lax.rsqrt(var2 + BN_EPS)
    y16 = y.astype(jnp.bfloat16).astype(jnp.float32)
    z = (y16 - mean2) * inv2
    nrm = jnp.linalg.norm(z, axis=-1, keepdims=True)
    return z / jnp.maximum(nrm, L2_EPS)


if __name__ == "__main__":
    N, C, H, W = 32, 4, 16, 16
    FEAT_DIM, MLP_DIM, OUT_DIM = 32, 64, 16

    key = jax.random.PRNGKey(0)
    k_img, k_bb, k_w1, k_w2 = jax.random.split(key, 4)

    images = jax.random.normal(k_img, (N, C, H, W), dtype=jnp.float32)
    backbone_w = 0.02 * jax.random.normal(k_bb, (C * H * W, FEAT_DIM), jnp.float32)
    w1 = 0.05 * jax.random.normal(k_w1, (FEAT_DIM, MLP_DIM), jnp.float32)
    gamma1 = jnp.ones((MLP_DIM,), jnp.float32)   # BatchNorm1d default weight
    beta1 = jnp.zeros((MLP_DIM,), jnp.float32)   # BatchNorm1d default bias
    w2 = 0.05 * jax.random.normal(k_w2, (MLP_DIM, OUT_DIM), jnp.float32)

    fwd = jax.jit(mlp_probe_forward)

    # Divisible batch: auto tile selection gives >=2 batch tiles, exercising
    # pipelining, cross-tile BN reduction and the parallel batch axis.
    out = jax.block_until_ready(fwd(images, backbone_w, w1, gamma1, beta1, w2))
    assert out.shape == (N, OUT_DIM)
    row_norms = jnp.linalg.norm(out, axis=-1)
    assert bool(jnp.all(jnp.abs(row_norms - 1.0) < 1e-3)), "rows not unit-norm"
    ref = _reference_forward(images, backbone_w, w1, gamma1, beta1, w2)
    assert bool(jnp.allclose(out, ref, atol=5e-3, rtol=5e-3)), "mismatch vs ref"

    # Non-divisible batch: exercises the zero-pad + masked-BN-stats path.
    N2 = 19
    out2 = jax.block_until_ready(
        fwd(images[:N2], backbone_w, w1, gamma1, beta1, w2))
    ref2 = _reference_forward(images[:N2], backbone_w, w1, gamma1, beta1, w2)
    assert out2.shape == (N2, OUT_DIM)
    assert bool(jnp.allclose(out2, ref2, atol=5e-3, rtol=5e-3)), \
        "mismatch vs ref (padded batch)"

    print("KERNEL_OK")
</pallas_src>

<mosaic_0001>
module attributes {stable_mosaic.version = 11 : i64} {
  func.func @kernel(%arg0: i32, %arg1: memref<16x128xbf16, #tpu.memory_space<vmem>>, %arg2: memref<1x128xf32, #tpu.memory_space<vmem>>, %arg3: memref<1x128xf32, #tpu.memory_space<vmem>>, %arg4: memref<128x128xbf16, #tpu.memory_space<vmem>>, %arg5: memref<16x128xbf16, #tpu.memory_space<vmem>>, %arg6: memref<1x2x128xf32, #tpu.memory_space<vmem>>) attributes {dimension_semantics = [#tpu.dimension_semantics<parallel>], iteration_bounds = array<i64: 2>, scalar_prefetch = 0 : i64, scratch_operands = 0 : i64, tpu.core_type = #tpu.core_type<tc>, window_params = [{transform_indices = @transform_0, window_bounds = array<i64: 16, 128>}, {pipeline_mode = #tpu.pipeline_mode<synchronous>, transform_indices = @transform_1, window_bounds = array<i64: 1, 128>}, {pipeline_mode = #tpu.pipeline_mode<synchronous>, transform_indices = @transform_2, window_bounds = array<i64: 1, 128>}, {pipeline_mode = #tpu.pipeline_mode<synchronous>, transform_indices = @transform_3, window_bounds = array<i64: 128, 128>}, {transform_indices = @transform_4, window_bounds = array<i64: 16, 128>}, {transform_indices = @transform_5, window_bounds = array<i64: 1, 2, 128>}]} {
    %c0 = arith.constant 0 : index
    %c0_0 = arith.constant 0 : index
    %0 = vector.load %arg1[%c0, %c0_0] : memref<16x128xbf16, #tpu.memory_space<vmem>>, vector<16x128xbf16>
    %1 = arith.extf %0 : vector<16x128xbf16> to vector<16x128xf32>
    %c0_1 = arith.constant 0 : index
    %c0_2 = arith.constant 0 : index
    %2 = vector.load %arg2[%c0_1, %c0_2] : memref<1x128xf32, #tpu.memory_space<vmem>>, vector<1x128xf32>
    %3 = vector.broadcast %2 : vector<1x128xf32> to vector<16x128xf32>
    %4 = arith.mulf %1, %3 : vector<16x128xf32>
    %c0_3 = arith.constant 0 : index
    %c0_4 = arith.constant 0 : index
    %5 = vector.load %arg3[%c0_3, %c0_4] : memref<1x128xf32, #tpu.memory_space<vmem>>, vector<1x128xf32>
    %6 = vector.broadcast %5 : vector<1x128xf32> to vector<16x128xf32>
    %7 = arith.addf %4, %6 : vector<16x128xf32>
    %cst = arith.constant 0.000000e+00 : f32
    %8 = vector.broadcast %cst : f32 to vector<16x128xf32>
    %9 = arith.maximumf %7, %8 : vector<16x128xf32>
    %10 = arith.truncf %9 : vector<16x128xf32> to vector<16x128xbf16>
    %c0_5 = arith.constant 0 : index
    %c0_6 = arith.constant 0 : index
    %11 = vector.load %arg4[%c0_5, %c0_6] : memref<128x128xbf16, #tpu.memory_space<vmem>>, vector<128x128xbf16>
    %cst_7 = arith.constant dense<0.000000e+00> : vector<16x128xf32>
    %12 = tpu.matmul %10, %11, %cst_7 {dimension_numbers = #tpu.dot_dimension_numbers<[1], [0], [0], [1], [0, 0, 1, 1], [], []>} : vector<16x128xbf16>, vector<128x128xbf16>, vector<16x128xf32> -> vector<16x128xf32>
    %c16_i32 = arith.constant 16 : i32
    %13 = arith.muli %arg0, %c16_i32 : i32
    %14 = tpu.iota {dimensions = array<i32: 0>} : vector<16x128xi32>
    %15 = vector.broadcast %13 : i32 to vector<16x128xi32>
    %16 = arith.addi %15, %14 : vector<16x128xi32>
    %c32_i32 = arith.constant 32 : i32
    %17 = vector.broadcast %c32_i32 : i32 to vector<16x128xi32>
    %18 = arith.cmpi slt, %16, %17 : vector<16x128xi32>
    %cst_8 = arith.constant 0.000000e+00 : f32
    %19 = vector.broadcast %cst_8 : f32 to vector<16x128xf32>
    %20 = arith.select %18, %12, %19 : vector<16x128xi1>, vector<16x128xf32>
    %21 = arith.truncf %20 : vector<16x128xf32> to vector<16x128xbf16>
    %c0_9 = arith.constant 0 : index
    %c0_10 = arith.constant 0 : index
    %22 = vector.load %arg5[%c0_9, %c0_10] : memref<16x128xbf16, #tpu.memory_space<vmem>>, vector<16x128xbf16>
    tpu.vector_store %arg5[%c0_9, %c0_10], %21 {strides = array<i32>} : memref<16x128xbf16, #tpu.memory_space<vmem>>, vector<16x128xbf16>,
    %cst_11 = arith.constant dense<0.000000e+00> : vector<128xf32>
    %23 = vector.multi_reduction <add>, %20, %cst_11 [0] : vector<16x128xf32> to vector<128xf32>
    %24 = vector.shape_cast %23 : vector<128xf32> to vector<1x128xf32>
    %25 = arith.mulf %20, %20 : vector<16x128xf32>
    %cst_12 = arith.constant dense<0.000000e+00> : vector<128xf32>
    %26 = vector.multi_reduction <add>, %25, %cst_12 [0] : vector<16x128xf32> to vector<128xf32>
    %27 = vector.shape_cast %26 : vector<128xf32> to vector<1x128xf32>
    %28 = tpu.concatenate %24, %27 in 0 : vector<1x128xf32>, vector<1x128xf32> -> vector<2x128xf32>
    %29 = vector.shape_cast %28 : vector<2x128xf32> to vector<1x2x128xf32>
    %c0_13 = arith.constant 0 : index
    %c0_14 = arith.constant 0 : index
    %c0_15 = arith.constant 0 : index
    %30 = vector.load %arg6[%c0_13, %c0_14, %c0_15] : memref<1x2x128xf32, #tpu.memory_space<vmem>>, vector<1x2x128xf32>
    tpu.vector_store %arg6[%c0_13, %c0_14, %c0_15], %29 {strides = array<i32>} : memref<1x2x128xf32, #tpu.memory_space<vmem>>, vector<1x2x128xf32>,
    return
  }
  func.func @transform_0(%arg0: i32) -> (i32, i32) {
    %c0_i32 = arith.constant 0 : i32
    %c0_i32_0 = arith.constant 0 : i32
    return %arg0, %c0_i32 : i32, i32
  }
  func.func @transform_1(%arg0: i32) -> (i32, i32) {
    %c0_i32 = arith.constant 0 : i32
    %c0_i32_0 = arith.constant 0 : i32
    %c0_i32_1 = arith.constant 0 : i32
    return %c0_i32, %c0_i32_0 : i32, i32
  }
  func.func @transform_2(%arg0: i32) -> (i32, i32) {
    %c0_i32 = arith.constant 0 : i32
    %c0_i32_0 = arith.constant 0 : i32
    %c0_i32_1 = arith.constant 0 : i32
    return %c0_i32, %c0_i32_0 : i32, i32
  }
  func.func @transform_3(%arg0: i32) -> (i32, i32) {
    %c0_i32 = arith.constant 0 : i32
    %c0_i32_0 = arith.constant 0 : i32
    %c0_i32_1 = arith.constant 0 : i32
    return %c0_i32, %c0_i32_0 : i32, i32
  }
  func.func @transform_4(%arg0: i32) -> (i32, i32) {
    %c0_i32 = arith.constant 0 : i32
    %c0_i32_0 = arith.constant 0 : i32
    return %arg0, %c0_i32 : i32, i32
  }
  func.func @transform_5(%arg0: i32) -> (i32, i32, i32) {
    %c0_i32 = arith.constant 0 : i32
    %c0_i32_0 = arith.constant 0 : i32
    %c0_i32_1 = arith.constant 0 : i32
    return %arg0, %c0_i32, %c0_i32_0 : i32, i32, i32
  }
}

module attributes {stable_mosaic.version = 11 : i64} {
  func.func @_stage1_kernel(%arg0: i32, %arg1: i32, %arg2: memref<16x1024xbf16, #tpu.memory_space<vmem>>, %arg3: memref<1024x128xbf16, #tpu.memory_space<vmem>>, %arg4: memref<128x128xbf16, #tpu.memory_space<vmem>>, %arg5: memref<16x128xbf16, #tpu.memory_space<vmem>>, %arg6: memref<1x2x128xf32, #tpu.memory_space<vmem>>, %arg7: memref<16x128xf32, #tpu.memory_space<vmem>>) attributes {dimension_semantics = [#tpu.dimension_semantics<parallel>, #tpu.dimension_semantics<arbitrary>], iteration_bounds = array<i64: 2, 1>, scalar_prefetch = 0 : i64, scratch_operands = 1 : i64, tpu.core_type = #tpu.core_type<tc>, window_params = [{transform_indices = @transform_0, window_bounds = array<i64: 16, 1024>}, {transform_indices = @transform_1, window_bounds = array<i64: 1024, 128>}, {pipeline_mode = #tpu.pipeline_mode<synchronous>, transform_indices = @transform_2, window_bounds = array<i64: 128, 128>}, {transform_indices = @transform_3, window_bounds = array<i64: 16, 128>}, {transform_indices = @transform_4, window_bounds = array<i64: 1, 2, 128>}]} {
    %c0_i32 = arith.constant 0 : i32
    %0 = arith.cmpi eq, %arg1, %c0_i32 : i32
    %1 = arith.extui %0 : i1 to i32
    %c0_i32_0 = arith.constant 0 : i32
    %2 = arith.cmpi ne, %1, %c0_i32_0 : i32
    scf.if %2 {
      %cst_10 = arith.constant 0.000000e+00 : f32
      %12 = vector.broadcast %cst_10 : f32 to vector<16x128xf32>
      %c0_11 = arith.constant 0 : index
      %c0_12 = arith.constant 0 : index
      %13 = vector.load %arg7[%c0_11, %c0_12] : memref<16x128xf32, #tpu.memory_space<vmem>>, vector<16x128xf32>
      tpu.vector_store %arg7[%c0_11, %c0_12], %12 {strides = array<i32>} : memref<16x128xf32, #tpu.memory_space<vmem>>, vector<16x128xf32>,
    } else {
    }
    %c0 = arith.constant 0 : index
    %c0_1 = arith.constant 0 : index
    %3 = vector.load %arg7[%c0, %c0_1] : memref<16x128xf32, #tpu.memory_space<vmem>>, vector<16x128xf32>
    %c0_2 = arith.constant 0 : index
    %c0_3 = arith.constant 0 : index
    %4 = vector.load %arg2[%c0_2, %c0_3] : memref<16x1024xbf16, #tpu.memory_space<vmem>>, vector<16x1024xbf16>
    %c0_4 = arith.constant 0 : index
    %c0_5 = arith.constant 0 : index
    %5 = vector.load %arg3[%c0_4, %c0_5] : memref<1024x128xbf16, #tpu.memory_space<vmem>>, vector<1024x128xbf16>
    %cst = arith.constant dense<0.000000e+00> : vector<16x128xf32>
    %6 = tpu.matmul %4, %5, %cst {dimension_numbers = #tpu.dot_dimension_numbers<[1], [0], [0], [1], [0, 0, 1, 1], [], []>} : vector<16x1024xbf16>, vector<1024x128xbf16>, vector<16x128xf32> -> vector<16x128xf32>
    %7 = arith.addf %3, %6 : vector<16x128xf32>
    %c0_6 = arith.constant 0 : index
    %c0_7 = arith.constant 0 : index
    %8 = vector.load %arg7[%c0_6, %c0_7] : memref<16x128xf32, #tpu.memory_space<vmem>>, vector<16x128xf32>
    tpu.vector_store %arg7[%c0_6, %c0_7], %7 {strides = array<i32>} : memref<16x128xf32, #tpu.memory_space<vmem>>, vector<16x128xf32>,
    %c0_i32_8 = arith.constant 0 : i32
    %9 = arith.cmpi eq, %arg1, %c0_i32_8 : i32
    %10 = arith.extui %9 : i1 to i32
    %c0_i32_9 = arith.constant 0 : i32
    %11 = arith.cmpi ne, %10, %c0_i32_9 : i32
    scf.if %11 {
      %c0_10 = arith.constant 0 : index
      %c0_11 = arith.constant 0 : index
      %12 = vector.load %arg7[%c0_10, %c0_11] : memref<16x128xf32, #tpu.memory_space<vmem>>, vector<16x128xf32>
      %13 = arith.truncf %12 : vector<16x128xf32> to vector<16x128xbf16>
      %c0_12 = arith.constant 0 : index
      %c0_13 = arith.constant 0 : index
      %14 = vector.load %arg4[%c0_12, %c0_13] : memref<128x128xbf16, #tpu.memory_space<vmem>>, vector<128x128xbf16>
      %cst_14 = arith.constant dense<0.000000e+00> : vector<16x128xf32>
      %15 = tpu.matmul %13, %14, %cst_14 {dimension_numbers = #tpu.dot_dimension_numbers<[1], [0], [0], [1], [0, 0, 1, 1], [], []>} : vector<16x128xbf16>, vector<128x128xbf16>, vector<16x128xf32> -> vector<16x128xf32>
      %16 = arith.truncf %15 : vector<16x128xf32> to vector<16x128xbf16>
      %c0_15 = arith.constant 0 : index
      %c0_16 = arith.constant 0 : index
      %17 = vector.load %arg5[%c0_15, %c0_16] : memref<16x128xbf16, #tpu.memory_space<vmem>>, vector<16x128xbf16>
      tpu.vector_store %arg5[%c0_15, %c0_16], %16 {strides = array<i32>} : memref<16x128xbf16, #tpu.memory_space<vmem>>, vector<16x128xbf16>,
      %cst_17 = arith.constant dense<0.000000e+00> : vector<128xf32>
      %18 = vector.multi_reduction <add>, %15, %cst_17 [0] : vector<16x128xf32> to vector<128xf32>
      %19 = vector.shape_cast %18 : vector<128xf32> to vector<1x128xf32>
      %20 = arith.mulf %15, %15 : vector<16x128xf32>
      %cst_18 = arith.constant dense<0.000000e+00> : vector<128xf32>
      %21 = vector.multi_reduction <add>, %20, %cst_18 [0] : vector<16x128xf32> to vector<128xf32>
      %22 = vector.shape_cast %21 : vector<128xf32> to vector<1x128xf32>
      %23 = tpu.concatenate %19, %22 in 0 : vector<1x128xf32>, vector<1x128xf32> -> vector<2x128xf32>
      %24 = vector.shape_cast %23 : vector<2x128xf32> to vector<1x2x128xf32>
      %c0_19 = arith.constant 0 : index
      %c0_20 = arith.constant 0 : index
      %c0_21 = arith.constant 0 : index
      %25 = vector.load %arg6[%c0_19, %c0_20, %c0_21] : memref<1x2x128xf32, #tpu.memory_space<vmem>>, vector<1x2x128xf32>
      tpu.vector_store %arg6[%c0_19, %c0_20, %c0_21], %24 {strides = array<i32>} : memref<1x2x128xf32, #tpu.memory_space<vmem>>, vector<1x2x128xf32>,
    } else {
    }
    return
  }
  func.func @transform_0(%arg0: i32, %arg1: i32) -> (i32, i32) {
    %c0_i32 = arith.constant 0 : i32
    return %arg0, %arg1 : i32, i32
  }
  func.func @transform_1(%arg0: i32, %arg1: i32) -> (i32, i32) {
    %c0_i32 = arith.constant 0 : i32
    %c0_i32_0 = arith.constant 0 : i32
    return %arg1, %c0_i32 : i32, i32
  }
  func.func @transform_2(%arg0: i32, %arg1: i32) -> (i32, i32) {
    %c0_i32 = arith.constant 0 : i32
    %c0_i32_0 = arith.constant 0 : i32
    %c0_i32_1 = arith.constant 0 : i32
    return %c0_i32, %c0_i32_0 : i32, i32
  }
  func.func @transform_3(%arg0: i32, %arg1: i32) -> (i32, i32) {
    %c0_i32 = arith.constant 0 : i32
    %c0_i32_0 = arith.constant 0 : i32
    return %arg0, %c0_i32 : i32, i32
  }
  func.func @transform_4(%arg0: i32, %arg1: i32) -> (i32, i32, i32) {
    %c0_i32 = arith.constant 0 : i32
    %c0_i32_0 = arith.constant 0 : i32
    %c0_i32_1 = arith.constant 0 : i32
    return %arg0, %c0_i32, %c0_i32_0 : i32, i32, i32
  }
}

module attributes {stable_mosaic.version = 11 : i64} {
  func.func @_stage3_kernel(%arg0: i32, %arg1: memref<16x128xbf16, #tpu.memory_space<vmem>>, %arg2: memref<1x128xf32, #tpu.memory_space<vmem>>, %arg3: memref<1x128xf32, #tpu.memory_space<vmem>>, %arg4: memref<16x128xf32, #tpu.memory_space<vmem>>) attributes {dimension_semantics = [#tpu.dimension_semantics<parallel>], iteration_bounds = array<i64: 2>, scalar_prefetch = 0 : i64, scratch_operands = 0 : i64, tpu.core_type = #tpu.core_type<tc>, window_params = [{transform_indices = @transform_0, window_bounds = array<i64: 16, 128>}, {pipeline_mode = #tpu.pipeline_mode<synchronous>, transform_indices = @transform_1, window_bounds = array<i64: 1, 128>}, {pipeline_mode = #tpu.pipeline_mode<synchronous>, transform_indices = @transform_2, window_bounds = array<i64: 1, 128>}, {transform_indices = @transform_3, window_bounds = array<i64: 16, 128>}]} {
    %c0 = arith.constant 0 : index
    %c0_0 = arith.constant 0 : index
    %0 = vector.load %arg1[%c0, %c0_0] : memref<16x128xbf16, #tpu.memory_space<vmem>>, vector<16x128xbf16>
    %1 = arith.extf %0 : vector<16x128xbf16> to vector<16x128xf32>
    %c0_1 = arith.constant 0 : index
    %c0_2 = arith.constant 0 : index
    %2 = vector.load %arg2[%c0_1, %c0_2] : memref<1x128xf32, #tpu.memory_space<vmem>>, vector<1x128xf32>
    %3 = vector.broadcast %2 : vector<1x128xf32> to vector<16x128xf32>
    %4 = arith.mulf %1, %3 : vector<16x128xf32>
    %c0_3 = arith.constant 0 : index
    %c0_4 = arith.constant 0 : index
    %5 = vector.load %arg3[%c0_3, %c0_4] : memref<1x128xf32, #tpu.memory_space<vmem>>, vector<1x128xf32>
    %6 = vector.broadcast %5 : vector<1x128xf32> to vector<16x128xf32>
    %7 = arith.addf %4, %6 : vector<16x128xf32>
    %8 = arith.mulf %7, %7 : vector<16x128xf32>
    %cst = arith.constant dense<0.000000e+00> : vector<16xf32>
    %9 = vector.multi_reduction <add>, %8, %cst [1] : vector<16x128xf32> to vector<16xf32>
    %10 = vector.shape_cast %9 : vector<16xf32> to vector<16x1xf32>
    %cst_5 = arith.constant 1.000000e-24 : f32
    %11 = vector.broadcast %cst_5 : f32 to vector<16x1xf32>
    %12 = arith.maximumf %10, %11 : vector<16x1xf32>
    %13 = math.rsqrt %12 : vector<16x1xf32>
    %14 = vector.broadcast %13 : vector<16x1xf32> to vector<16x128xf32>
    %15 = arith.mulf %7, %14 : vector<16x128xf32>
    %c0_6 = arith.constant 0 : index
    %c0_7 = arith.constant 0 : index
    %16 = vector.load %arg4[%c0_6, %c0_7] : memref<16x128xf32, #tpu.memory_space<vmem>>, vector<16x128xf32>
    tpu.vector_store %arg4[%c0_6, %c0_7], %15 {strides = array<i32>} : memref<16x128xf32, #tpu.memory_space<vmem>>, vector<16x128xf32>,
    return
  }
  func.func @transform_0(%arg0: i32) -> (i32, i32) {
    %c0_i32 = arith.constant 0 : i32
    %c0_i32_0 = arith.constant 0 : i32
    return %arg0, %c0_i32 : i32, i32
  }
  func.func @transform_1(%arg0: i32) -> (i32, i32) {
    %c0_i32 = arith.constant 0 : i32
    %c0_i32_0 = arith.constant 0 : i32
    %c0_i32_1 = arith.constant 0 : i32
    return %c0_i32, %c0_i32_0 : i32, i32
  }
  func.func @transform_2(%arg0: i32) -> (i32, i32) {
    %c0_i32 = arith.constant 0 : i32
    %c0_i32_0 = arith.constant 0 : i32
    %c0_i32_1 = arith.constant 0 : i32
    return %c0_i32, %c0_i32_0 : i32, i32
  }
  func.func @transform_3(%arg0: i32) -> (i32, i32) {
    %c0_i32 = arith.constant 0 : i32
    %c0_i32_0 = arith.constant 0 : i32
    return %arg0, %c0_i32 : i32, i32
  }
}

</mosaic_0001>

<llo_original>
// kernel: mlp_probe_forward.5
$region0: #{mlp_probe_forward.5}
  #allocation0 [shape = 'u32[]', space=smem, size = 0x4, offset = 0x4, fixed_abs, tag = 'smem constant byte address 0x4 - core index']
  #allocation1 [shape = 'u32[72,128]{1,0:T(1,128)}', space=vmem, size = 0x9000, scoped, tag = 'internal scratch']
  %s0 = inlined_call_operand.vmem [shape: bf16[32,128], index: 0, kind: input, shape index: {}]
  %s1 = inlined_call_operand.vmem [shape: f32[1,128], index: 1, kind: input, shape index: {}]
  %s2 = inlined_call_operand.vmem [shape: f32[1,128], index: 2, kind: input, shape index: {}]
  %s3 = inlined_call_operand.vmem [shape: f32[32,128], index: 3, kind: output, shape index: {}]
  %s4 = sld [smem:[#allocation0]]
  $region45: #{mlp_probe_forward.5} parent=0
    _
  %s6 = ssub.s32 1, %s4
  %s7 = scalar_select 0, %s6, %s4
  loop: start=0, step=1, limit=4
  $region2: #{mlp_probe_forward.5} parent=0 // loop_pre_header
    _
  $region3: #{mlp_probe_forward.5} parent=0 // loop_header
    %s9 = sphi 0, %s13
    %p10 = scmp.ge.s32.totalorder %s9, 4
    %s19 = sphi 0, %s21
    %s22 = sphi 0, %s19
    %s23 = sphi 0, %s22
    %s39 = sphi 0, %s23
    %s43 = sphi 0, %s43
    %s45 = sphi 0, %s43
    %s46 = sphi 0, %s45
    %s60 = sphi 0, %s46
    %s64 = sphi 0, %s64
    %s66 = sphi 0, %s64
    %s67 = sphi 0, %s66
    %s81 = sphi 0, %s67
    %s87 = sphi 0, %s89
    %s90 = sphi 0, %s87
    %s91 = sphi 0, %s90
    %s107 = sphi 0, %s91
  $region4: #{mlp_probe_forward.5} parent=0 // loop_header_branch
    %12 = sbr.rel (%p10) target = $region8
  $region5: #{mlp_probe_forward.5} parent=0 // loop_body
    %s14 = ssub.s32 %s9, 1
    %s15 = ssub.s32 %s9, 2
    %s16 = sadd.s32 %s9, 1
    %s17 = ssub.s32 %s9, %s16
    %p18 = scmp.eq.s32.totalorder %s17, 0
    %s20 = sadd.s32 %s19, 1
    %s21 = scalar_select %p18, %s19, %s20
    %p24 = pneg %p18
    %p25 = scmp.eq.s32.totalorder %s9, 1
    %p26 = por %p24, %p25
    %p27 = scmp.ne.s32.totalorder %s19, %s22
    %p28 = scmp.eq.s32.totalorder %s9, 0
    %p29 = por %p27, %p28
    %p30 = scmp.ne.s32.totalorder %s19, %s22
    %p31 = scmp.eq.s32.totalorder %s14, 1
    %p32 = por %p30, %p31
    %p33 = scmp.ne.s32.totalorder %s22, %s23
    %p34 = scmp.eq.s32.totalorder %s14, 0
    %p35 = por %p33, %p34
    %p36 = scmp.ne.s32.totalorder %s22, %s23
    %p37 = scmp.eq.s32.totalorder %s15, 1
    %p38 = por %p36, %p37
    %p40 = scmp.ne.s32.totalorder %s23, %s39
    %p41 = scmp.eq.s32.totalorder %s15, 0
    %p42 = por %p40, %p41
    %s44 = sadd.s32 %s43, 1
    %p47 = scmp.eq.s32.totalorder %s9, 1
    %p48 = scmp.ne.s32.totalorder %s43, %s45
    %p49 = scmp.eq.s32.totalorder %s9, 0
    %p50 = por %p48, %p49
    %p51 = scmp.ne.s32.totalorder %s43, %s45
    %p52 = scmp.eq.s32.totalorder %s14, 1
    %p53 = por %p51, %p52
    %p54 = scmp.ne.s32.totalorder %s45, %s46
    %p55 = scmp.eq.s32.totalorder %s14, 0
    %p56 = por %p54, %p55
    %p57 = scmp.ne.s32.totalorder %s45, %s46
    %p58 = scmp.eq.s32.totalorder %s15, 1
    %p59 = por %p57, %p58
    %p61 = scmp.ne.s32.totalorder %s46, %s60
    %p62 = scmp.eq.s32.totalorder %s15, 0
    %p63 = por %p61, %p62
    %s65 = sadd.s32 %s64, 1
    %p68 = scmp.eq.s32.totalorder %s9, 1
    %p69 = scmp.ne.s32.totalorder %s64, %s66
    %p70 = scmp.eq.s32.totalorder %s9, 0
    %p71 = por %p69, %p70
    %p72 = scmp.ne.s32.totalorder %s64, %s66
    %p73 = scmp.eq.s32.totalorder %s14, 1
    %p74 = por %p72, %p73
    %p75 = scmp.ne.s32.totalorder %s66, %s67
    %p76 = scmp.eq.s32.totalorder %s14, 0
    %p77 = por %p75, %p76
    %p78 = scmp.ne.s32.totalorder %s66, %s67
    %p79 = scmp.eq.s32.totalorder %s15, 1
    %p80 = por %p78, %p79
    %p82 = scmp.ne.s32.totalorder %s67, %s81
    %p83 = scmp.eq.s32.totalorder %s15, 0
    %p84 = por %p82, %p83
    %s85 = ssub.s32 %s9, %s16
    %p86 = scmp.eq.s32.totalorder %s85, 0
    %s88 = sadd.s32 %s87, 1
    %s89 = scalar_select %p86, %s87, %s88
    %p92 = pneg %p86
    %p93 = scmp.eq.s32.totalorder %s9, 1
    %p94 = por %p92, %p93
    %p95 = scmp.ne.s32.totalorder %s87, %s90
    %p96 = scmp.eq.s32.totalorder %s9, 0
    %p97 = por %p95, %p96
    %p98 = scmp.ne.s32.totalorder %s87, %s90
    %p99 = scmp.eq.s32.totalorder %s14, 1
    %p100 = por %p98, %p99
    %p101 = scmp.ne.s32.totalorder %s90, %s91
    %p102 = scmp.eq.s32.totalorder %s14, 0
    %p103 = por %p101, %p102
    %p104 = scmp.ne.s32.totalorder %s90, %s91
    %p105 = scmp.eq.s32.totalorder %s15, 1
    %p106 = por %p104, %p105
    %p108 = scmp.ne.s32.totalorder %s91, %s107
    %p109 = scmp.eq.s32.totalorder %s15, 0
    %p110 = por %p108, %p109
    %p111 = scmp.le.s32.totalorder 1, %s9
    %p112 = scmp.lt.s32.totalorder %s9, 3
    %p113 = pnand %p111, %p112
    %p114 = pneg %p113
    // Predicated region
    $region9: #{mlp_probe_forward.5} parent=5 // pred_check
      _
    $region10: #{mlp_probe_forward.5} parent=5 // pred_check_branch
      %116 = sbr.rel (%p113) target = $region12
    $region11: #{mlp_probe_forward.5} parent=5 // pred_region
      %s117 = ssub.s32 %s9, 1
      // Predicated region
      $region13: #{mlp_probe_forward.5} parent=11 // pred_check
        %p118 = pneg %p56
      $region14: #{mlp_probe_forward.5} parent=11 // pred_check_branch
        %120 = sbr.rel (%p118) target = $region16
      $region15: #{mlp_probe_forward.5} parent=11 // pred_region
        _
      $region16: #{mlp_probe_forward.5} parent=11 // pred_fallthru
        _
      // Predicated region
      $region17: #{mlp_probe_forward.5} parent=11 // pred_check
        %p121 = pneg %p77
      $region18: #{mlp_probe_forward.5} parent=11 // pred_check_branch
        %123 = sbr.rel (%p121) target = $region20
      $region19: #{mlp_probe_forward.5} parent=11 // pred_region
        _
      $region20: #{mlp_probe_forward.5} parent=11 // pred_fallthru
        _
    $region12: #{mlp_probe_forward.5} parent=5 // pred_fallthru
      _
    %p124 = scmp.lt.s32.totalorder %s9, 2
    // Predicated region
    $region21: #{mlp_probe_forward.5} parent=5 // pred_check
      %p125 = pneg %p124
    $region22: #{mlp_probe_forward.5} parent=5 // pred_check_branch
      %127 = sbr.rel (%p125) target = $region24
    $region23: #{mlp_probe_forward.5} parent=5 // pred_region
      // Predicated region
      $region25: #{mlp_probe_forward.5} parent=23 // pred_check
        %p128 = pneg %p29
      $region26: #{mlp_probe_forward.5} parent=23 // pred_check_branch
        %130 = sbr.rel (%p128) target = $region28
      $region27: #{mlp_probe_forward.5} parent=23 // pred_region
        %s131 = smul.u32 2, %s9
        %p132 = scmp.lt.s32.totalorder %s131, 3
        %s133 = scalar_select %p132, %s131, 3
        %s134 = smul.addr %s133, 4
        %s135 = scalar_lea.vmem %s0, %s134
        %s136 = smul.u32 2, %s9
      $region28: #{mlp_probe_forward.5} parent=23 // pred_fallthru
        _
    $region24: #{mlp_probe_forward.5} parent=5 // pred_fallthru
      _
    %p137 = scmp.le.s32.totalorder 1, %s9
    %p138 = scmp.lt.s32.totalorder %s9, 3
    %p139 = pnand %p137, %p138
    %p140 = pneg %p139
    // Predicated region
    $region29: #{mlp_probe_forward.5} parent=5 // pred_check
      _
    $region30: #{mlp_probe_forward.5} parent=5 // pred_check_branch
      %142 = sbr.rel (%p139) target = $region32
    $region31: #{mlp_probe_forward.5} parent=5 // pred_region
      %s143 = ssub.s32 %s9, 1
      %s144 = smul.u32 2, %s14
      %p145 = scmp.lt.s32.totalorder %s144, 3
      %s146 = scalar_select %p145, %s144, 3
      %s147 = smul.addr %s146, 4
      %s148 = scalar_lea.vmem %s0, %s147
      %p149 = pneg %p35
      %p150 = pneg %p32
      %p151 = pneg %p56
      %p152 = pneg %p53
      %p153 = pneg %p77
      %p154 = pneg %p74
      %p155 = pneg %p103
      %p156 = pneg %p100
      %s157 = smul.u32 2, %s14
      %p158 = scmp.lt.s32.totalorder %s157, 3
      %s159 = scalar_select %p158, %s157, 3
      %s160 = smul.addr %s159, 8
      %s161 = scalar_lea.vmem %s3, %s160
      %s162 = smul.u32 2, %s14
      %p163 = scmp.lt.s32.totalorder %s162, 3
      %s164 = scalar_select %p163, %s162, 3
      %s165 = smul.addr %s164, 4
      %s166 = scalar_lea.vmem %s0, %s165
      %s167 = smul.u32 2, %s14
      %s168 = smul.u32 2, %s14
      %p169 = scmp.lt.s32.totalorder %s168, 3
      %s170 = scalar_select %p169, %s168, 3
      %s171 = smul.addr %s170, 8
      %s172 = scalar_lea.vmem %s3, %s171
      %s173 = smul.u32 2, %s14
      %v174 = vld [vmem:[%s166] sm:$0xf]
      %v175 = vld [vmem:[%s166 + $0x4] sm:$0xf]
      %v176 = vunpack.c.l.bf16 %v174
      %v177 = vunpack.c.l.bf16 %v175
      %v178 = vld [vmem:[%s1] sm:$0x1]
      %v180 = vperm.slane %v178, 0
      %v182 = vmul.f32 %v176, %v180
      %v183 = vmul.f32 %v177, %v180
      %v184 = vld [vmem:[%s2] sm:$0x1]
      %v186 = vperm.slane %v184, 0
      %v188 = vadd.f32 %v182, %v186
      %v189 = vadd.f32 %v183, %v186
      %v190 = vmul.f32 %v188, %v188
      %v191 = vmul.f32 %v189, %v189
      %192 = vadd.xlane.f32.xlu0 %v190
      %v193 = vpop.xlane.xlu0 %192
      %194 = vadd.xlane.f32.xlu0 %v191
      %v195 = vpop.xlane.xlu0 %194
      %v196 = vmax.f32 %v193, 1e-24
      %v197 = vmax.f32 %v195, 1e-24
      %v198 = vrsqrt.pop %v196
      %v199 = vmul.f32 %v198, %v196
      %v200 = vmul.f32 %v199, %v198
      %v201 = vmul.f32 0.5, %v200
      %v202 = vsub.f32 1.5, %v201
      %v203 = vmul.f32 %v198, %v202
      %vm204 = vweird.f32 %v196
      %vm205 = vweird.f32 %v198
      %vm206 = vmor %vm204, %vm205
      %v207 = vsel %vm206, %v198, %v203
      %v208 = vrsqrt.pop %v197
      %v209 = vmul.f32 %v208, %v197
      %v210 = vmul.f32 %v209, %v208
      %v211 = vmul.f32 0.5, %v210
      %v212 = vsub.f32 1.5, %v211
      %v213 = vmul.f32 %v208, %v212
      %vm214 = vweird.f32 %v197
      %vm215 = vweird.f32 %v208
      %vm216 = vmor %vm214, %vm215
      %v217 = vsel %vm216, %v208, %v213
      %v218 = vmul.f32 %v188, %v207
      %v219 = vmul.f32 %v189, %v217
      %220 = vst [vmem:[%s172] sm:$0xff] %v218
      %221 = vst [vmem:[%s172 + $0x8] sm:$0xff] %v219
      %s222 = smul.u32 2, %s14
      %p223 = scmp.lt.s32.totalorder %s222, 3
      %s224 = scalar_select %p223, %s222, 3
      %s225 = smul.addr %s224, 8
      %s226 = scalar_lea.vmem %s3, %s225
      // Predicated region
      $region33: #{mlp_probe_forward.5} parent=31 // pred_check
        %p227 = pneg %p100
      $region34: #{mlp_probe_forward.5} parent=31 // pred_check_branch
        %229 = sbr.rel (%p227) target = $region36
      $region35: #{mlp_probe_forward.5} parent=31 // pred_region
        %s230 = smul.u32 2, %s14
      $region36: #{mlp_probe_forward.5} parent=31 // pred_fallthru
        _
    $region32: #{mlp_probe_forward.5} parent=5 // pred_fallthru
      _
    %p231 = scmp.le.s32.totalorder 2, %s9
    // Predicated region
    $region37: #{mlp_probe_forward.5} parent=5 // pred_check
      %p232 = pneg %p231
    $region38: #{mlp_probe_forward.5} parent=5 // pred_check_branch
      %234 = sbr.rel (%p232) target = $region40
    $region39: #{mlp_probe_forward.5} parent=5 // pred_region
      %s235 = ssub.s32 %s9, 2
      // Predicated region
      $region41: #{mlp_probe_forward.5} parent=39 // pred_check
        %p236 = pneg %p106
      $region42: #{mlp_probe_forward.5} parent=39 // pred_check_branch
        %238 = sbr.rel (%p236) target = $region44
      $region43: #{mlp_probe_forward.5} parent=39 // pred_region
        %s239 = smul.u32 2, %s15
        %p240 = scmp.lt.s32.totalorder %s239, 3
        %s241 = scalar_select %p240, %s239, 3
        %s242 = smul.addr %s241, 8
        %s243 = scalar_lea.vmem %s3, %s242
      $region44: #{mlp_probe_forward.5} parent=39 // pred_fallthru
        _
    $region40: #{mlp_probe_forward.5} parent=5 // pred_fallthru
      _
  $region6: #{mlp_probe_forward.5} parent=0 // loop_footer
    %s13 = sadd.s32 1, %s9
  $region7: #{mlp_probe_forward.5} parent=0 // loop_footer_branch
    %8 = sbr.rel target = $region3
  $region8: #{mlp_probe_forward.5} parent=0 // loop_exit
    _

// kernel: mlp_probe_forward.4
$region0: #{mlp_probe_forward.4}
  #allocation0 [shape = 'u32[]', space=smem, size = 0x4, offset = 0x4, fixed_abs, tag = 'smem constant byte address 0x4 - core index']
  #allocation1 [shape = 'u32[72,128]{1,0:T(1,128)}', space=vmem, size = 0x9000, scoped, tag = 'internal scratch']
  %s0 = inlined_call_operand.vmem [shape: bf16[32,128], index: 0, kind: input, shape index: {}]
  %s1 = inlined_call_operand.vmem [shape: f32[1,128], index: 1, kind: input, shape index: {}]
  %s2 = inlined_call_operand.vmem [shape: f32[1,128], index: 2, kind: input, shape index: {}]
  %s3 = inlined_call_operand.vmem [shape: bf16[128,128], index: 3, kind: input, shape index: {}]
  %s4 = inlined_call_operand.vmem [shape: bf16[32,128], index: 4, kind: output, shape index: {0}]
  %s5 = inlined_call_operand.vmem [shape: f32[2,2,128], index: 5, kind: output, shape index: {1}]
  %6 = xla_tuple %s4, %s5
  %s7 = sld [smem:[#allocation0]]
  $region57: #{mlp_probe_forward.4} parent=0
    _
  %s9 = ssub.s32 1, %s7
  %s10 = scalar_select 0, %s9, %s7
  loop: start=0, step=1, limit=4
  $region2: #{mlp_probe_forward.4} parent=0 // loop_pre_header
    _
  $region3: #{mlp_probe_forward.4} parent=0 // loop_header
    %s12 = sphi 0, %s16
    %p13 = scmp.ge.s32.totalorder %s12, 4
    %s22 = sphi 0, %s24
    %s25 = sphi 0, %s22
    %s26 = sphi 0, %s25
    %s42 = sphi 0, %s26
    %s46 = sphi 0, %s46
    %s48 = sphi 0, %s46
    %s49 = sphi 0, %s48
    %s63 = sphi 0, %s49
    %s67 = sphi 0, %s67
    %s69 = sphi 0, %s67
    %s70 = sphi 0, %s69
    %s84 = sphi 0, %s70
    %s88 = sphi 0, %s88
    %s90 = sphi 0, %s88
    %s91 = sphi 0, %s90
    %s105 = sphi 0, %s91
    %s111 = sphi 0, %s113
    %s114 = sphi 0, %s111
    %s115 = sphi 0, %s114
    %s131 = sphi 0, %s115
    %s137 = sphi 0, %s139
    %s140 = sphi 0, %s137
    %s141 = sphi 0, %s140
    %s157 = sphi 0, %s141
  $region4: #{mlp_probe_forward.4} parent=0 // loop_header_branch
    %15 = sbr.rel (%p13) target = $region8
  $region5: #{mlp_probe_forward.4} parent=0 // loop_body
    %s17 = ssub.s32 %s12, 1
    %s18 = ssub.s32 %s12, 2
    %s19 = sadd.s32 %s12, 1
    %s20 = ssub.s32 %s12, %s19
    %p21 = scmp.eq.s32.totalorder %s20, 0
    %s23 = sadd.s32 %s22, 1
    %s24 = scalar_select %p21, %s22, %s23
    %p27 = pneg %p21
    %p28 = scmp.eq.s32.totalorder %s12, 1
    %p29 = por %p27, %p28
    %p30 = scmp.ne.s32.totalorder %s22, %s25
    %p31 = scmp.eq.s32.totalorder %s12, 0
    %p32 = por %p30, %p31
    %p33 = scmp.ne.s32.totalorder %s22, %s25
    %p34 = scmp.eq.s32.totalorder %s17, 1
    %p35 = por %p33, %p34
    %p36 = scmp.ne.s32.totalorder %s25, %s26
    %p37 = scmp.eq.s32.totalorder %s17, 0
    %p38 = por %p36, %p37
    %p39 = scmp.ne.s32.totalorder %s25, %s26
    %p40 = scmp.eq.s32.totalorder %s18, 1
    %p41 = por %p39, %p40
    %p43 = scmp.ne.s32.totalorder %s26, %s42
    %p44 = scmp.eq.s32.totalorder %s18, 0
    %p45 = por %p43, %p44
    %s47 = sadd.s32 %s46, 1
    %p50 = scmp.eq.s32.totalorder %s12, 1
    %p51 = scmp.ne.s32.totalorder %s46, %s48
    %p52 = scmp.eq.s32.totalorder %s12, 0
    %p53 = por %p51, %p52
    %p54 = scmp.ne.s32.totalorder %s46, %s48
    %p55 = scmp.eq.s32.totalorder %s17, 1
    %p56 = por %p54, %p55
    %p57 = scmp.ne.s32.totalorder %s48, %s49
    %p58 = scmp.eq.s32.totalorder %s17, 0
    %p59 = por %p57, %p58
    %p60 = scmp.ne.s32.totalorder %s48, %s49
    %p61 = scmp.eq.s32.totalorder %s18, 1
    %p62 = por %p60, %p61
    %p64 = scmp.ne.s32.totalorder %s49, %s63
    %p65 = scmp.eq.s32.totalorder %s18, 0
    %p66 = por %p64, %p65
    %s68 = sadd.s32 %s67, 1
    %p71 = scmp.eq.s32.totalorder %s12, 1
    %p72 = scmp.ne.s32.totalorder %s67, %s69
    %p73 = scmp.eq.s32.totalorder %s12, 0
    %p74 = por %p72, %p73
    %p75 = scmp.ne.s32.totalorder %s67, %s69
    %p76 = scmp.eq.s32.totalorder %s17, 1
    %p77 = por %p75, %p76
    %p78 = scmp.ne.s32.totalorder %s69, %s70
    %p79 = scmp.eq.s32.totalorder %s17, 0
    %p80 = por %p78, %p79
    %p81 = scmp.ne.s32.totalorder %s69, %s70
    %p82 = scmp.eq.s32.totalorder %s18, 1
    %p83 = por %p81, %p82
    %p85 = scmp.ne.s32.totalorder %s70, %s84
    %p86 = scmp.eq.s32.totalorder %s18, 0
    %p87 = por %p85, %p86
    %s89 = sadd.s32 %s88, 1
    %p92 = scmp.eq.s32.totalorder %s12, 1
    %p93 = scmp.ne.s32.totalorder %s88, %s90
    %p94 = scmp.eq.s32.totalorder %s12, 0
    %p95 = por %p93, %p94
    %p96 = scmp.ne.s32.totalorder %s88, %s90
    %p97 = scmp.eq.s32.totalorder %s17, 1
    %p98 = por %p96, %p97
    %p99 = scmp.ne.s32.totalorder %s90, %s91
    %p100 = scmp.eq.s32.totalorder %s17, 0
    %p101 = por %p99, %p100
    %p102 = scmp.ne.s32.totalorder %s90, %s91
    %p103 = scmp.eq.s32.totalorder %s18, 1
    %p104 = por %p102, %p103
    %p106 = scmp.ne.s32.totalorder %s91, %s105
    %p107 = scmp.eq.s32.totalorder %s18, 0
    %p108 = por %p106, %p107
    %s109 = ssub.s32 %s12, %s19
    %p110 = scmp.eq.s32.totalorder %s109, 0
    %s112 = sadd.s32 %s111, 1
    %s113 = scalar_select %p110, %s111, %s112
    %p116 = pneg %p110
    %p117 = scmp.eq.s32.totalorder %s12, 1
    %p118 = por %p116, %p117
    %p119 = scmp.ne.s32.totalorder %s111, %s114
    %p120 = scmp.eq.s32.totalorder %s12, 0
    %p121 = por %p119, %p120
    %p122 = scmp.ne.s32.totalorder %s111, %s114
    %p123 = scmp.eq.s32.totalorder %s17, 1
    %p124 = por %p122, %p123
    %p125 = scmp.ne.s32.totalorder %s114, %s115
    %p126 = scmp.eq.s32.totalorder %s17, 0
    %p127 = por %p125, %p126
    %p128 = scmp.ne.s32.totalorder %s114, %s115
    %p129 = scmp.eq.s32.totalorder %s18, 1
    %p130 = por %p128, %p129
    %p132 = scmp.ne.s32.totalorder %s115, %s131
    %p133 = scmp.eq.s32.totalorder %s18, 0
    %p134 = por %p132, %p133
    %s135 = ssub.s32 %s12, %s19
    %p136 = scmp.eq.s32.totalorder %s135, 0
    %s138 = sadd.s32 %s137, 1
    %s139 = scalar_select %p136, %s137, %s138
    %p142 = pneg %p136
    %p143 = scmp.eq.s32.totalorder %s12, 1
    %p144 = por %p142, %p143
    %p145 = scmp.ne.s32.totalorder %s137, %s140
    %p146 = scmp.eq.s32.totalorder %s12, 0
    %p147 = por %p145, %p146
    %p148 = scmp.ne.s32.totalorder %s137, %s140
    %p149 = scmp.eq.s32.totalorder %s17, 1
    %p150 = por %p148, %p149
    %p151 = scmp.ne.s32.totalorder %s140, %s141
    %p152 = scmp.eq.s32.totalorder %s17, 0
    %p153 = por %p151, %p152
    %p154 = scmp.ne.s32.totalorder %s140, %s141
    %p155 = scmp.eq.s32.totalorder %s18, 1
    %p156 = por %p154, %p155
    %p158 = scmp.ne.s32.totalorder %s141, %s157
    %p159 = scmp.eq.s32.totalorder %s18, 0
    %p160 = por %p158, %p159
    %p161 = scmp.le.s32.totalorder 1, %s12
    %p162 = scmp.lt.s32.totalorder %s12, 3
    %p163 = pnand %p161, %p162
    %p164 = pneg %p163
    // Predicated region
    $region9: #{mlp_probe_forward.4} parent=5 // pred_check
      _
    $region10: #{mlp_probe_forward.4} parent=5 // pred_check_branch
      %166 = sbr.rel (%p163) target = $region12
    $region11: #{mlp_probe_forward.4} parent=5 // pred_region
      %s167 = ssub.s32 %s12, 1
      // Predicated region
      $region13: #{mlp_probe_forward.4} parent=11 // pred_check
        %p168 = pneg %p59
      $region14: #{mlp_probe_forward.4} parent=11 // pred_check_branch
        %170 = sbr.rel (%p168) target = $region16
      $region15: #{mlp_probe_forward.4} parent=11 // pred_region
        _
      $region16: #{mlp_probe_forward.4} parent=11 // pred_fallthru
        _
      // Predicated region
      $region17: #{mlp_probe_forward.4} parent=11 // pred_check
        %p171 = pneg %p80
      $region18: #{mlp_probe_forward.4} parent=11 // pred_check_branch
        %173 = sbr.rel (%p171) target = $region20
      $region19: #{mlp_probe_forward.4} parent=11 // pred_region
        _
      $region20: #{mlp_probe_forward.4} parent=11 // pred_fallthru
        _
      // Predicated region
      $region21: #{mlp_probe_forward.4} parent=11 // pred_check
        %p174 = pneg %p101
      $region22: #{mlp_probe_forward.4} parent=11 // pred_check_branch
        %176 = sbr.rel (%p174) target = $region24
      $region23: #{mlp_probe_forward.4} parent=11 // pred_region
        _
      $region24: #{mlp_probe_forward.4} parent=11 // pred_fallthru
        _
    $region12: #{mlp_probe_forward.4} parent=5 // pred_fallthru
      _
    %p177 = scmp.lt.s32.totalorder %s12, 2
    // Predicated region
    $region25: #{mlp_probe_forward.4} parent=5 // pred_check
      %p178 = pneg %p177
    $region26: #{mlp_probe_forward.4} parent=5 // pred_check_branch
      %180 = sbr.rel (%p178) target = $region28
    $region27: #{mlp_probe_forward.4} parent=5 // pred_region
      // Predicated region
      $region29: #{mlp_probe_forward.4} parent=27 // pred_check
        %p181 = pneg %p32
      $region30: #{mlp_probe_forward.4} parent=27 // pred_check_branch
        %183 = sbr.rel (%p181) target = $region32
      $region31: #{mlp_probe_forward.4} parent=27 // pred_region
        %s184 = smul.u32 2, %s12
        %p185 = scmp.lt.s32.totalorder %s184, 3
        %s186 = scalar_select %p185, %s184, 3
        %s187 = smul.addr %s186, 4
        %s188 = scalar_lea.vmem %s0, %s187
        %s189 = smul.u32 2, %s12
      $region32: #{mlp_probe_forward.4} parent=27 // pred_fallthru
        _
    $region28: #{mlp_probe_forward.4} parent=5 // pred_fallthru
      _
    %p190 = scmp.le.s32.totalorder 1, %s12
    %p191 = scmp.lt.s32.totalorder %s12, 3
    %p192 = pnand %p190, %p191
    %p193 = pneg %p192
    // Predicated region
    $region33: #{mlp_probe_forward.4} parent=5 // pred_check
      _
    $region34: #{mlp_probe_forward.4} parent=5 // pred_check_branch
      %195 = sbr.rel (%p192) target = $region36
    $region35: #{mlp_probe_forward.4} parent=5 // pred_region
      %s196 = ssub.s32 %s12, 1
      %s197 = smul.u32 2, %s17
      %p198 = scmp.lt.s32.totalorder %s197, 3
      %s199 = scalar_select %p198, %s197, 3
      %s200 = smul.addr %s199, 4
      %s201 = scalar_lea.vmem %s0, %s200
      %p202 = pneg %p38
      %p203 = pneg %p35
      %p204 = pneg %p59
      %p205 = pneg %p56
      %p206 = pneg %p80
      %p207 = pneg %p77
      %p208 = pneg %p101
      %p209 = pneg %p98
      %p210 = pneg %p127
      %p211 = pneg %p124
      %s212 = smul.u32 2, %s17
      %p213 = scmp.lt.s32.totalorder %s212, 3
      %s214 = scalar_select %p213, %s212, 3
      %s215 = smul.addr %s214, 4
      %s216 = scalar_lea.vmem %s4, %s215
      %p217 = pneg %p153
      %p218 = pneg %p150
      %p219 = scmp.lt.s32.totalorder %s17, 1
      %s220 = scalar_select %p219, %s17, 1
      %s221 = smul.addr %s220, 2
      %s222 = scalar_lea.vmem %s5, %s221
      %s223 = smul.u32 2, %s17
      %p224 = scmp.lt.s32.totalorder %s223, 3
      %s225 = scalar_select %p224, %s223, 3
      %s226 = smul.addr %s225, 4
      %s227 = scalar_lea.vmem %s0, %s226
      %s228 = smul.u32 2, %s17
      %s229 = smul.u32 2, %s17
      %p230 = scmp.lt.s32.totalorder %s229, 3
      %s231 = scalar_select %p230, %s229, 3
      %s232 = smul.addr %s231, 4
      %s233 = scalar_lea.vmem %s4, %s232
      %s234 = smul.u32 2, %s17
      %p235 = scmp.lt.s32.totalorder %s17, 1
      %s236 = scalar_select %p235, %s17, 1
      %s237 = smul.addr %s236, 2
      %s238 = scalar_lea.vmem %s5, %s237
      %v239 = vld [vmem:[%s227] sm:$0xf]
      %v240 = vld [vmem:[%s227 + $0x4] sm:$0xf]
      %v241 = vunpack.c.l.bf16 %v239
      %v242 = vunpack.c.l.bf16 %v240
      %v243 = vld [vmem:[%s1] sm:$0x1]
      %v245 = vperm.slane %v243, 0
      %v247 = vmul.f32 %v241, %v245
      %v248 = vmul.f32 %v242, %v245
      %v249 = vld [vmem:[%s2] sm:$0x1]
      %v251 = vperm.slane %v249, 0
      %v253 = vadd.f32 %v247, %v251
      %v254 = vadd.f32 %v248, %v251
      %v255 = vmax.f32 %v253, 0.0
      %v256 = vmax.f32 %v254, 0.0
      %v257 = vpack.c.bf16 %v256, %v255
      %v258 = vld [vmem:[%s3] sm:$0xf]
      %v259 = vld [vmem:[%s3 + $0x4] sm:$0xf]
      %v260 = vld [vmem:[%s3 + $0x8] sm:$0xf]
      %v261 = vld [vmem:[%s3 + $0xc] sm:$0xf]
      %v262 = vld [vmem:[%s3 + $0x10] sm:$0xf]
      %v263 = vld [vmem:[%s3 + $0x14] sm:$0xf]
      %v264 = vld [vmem:[%s3 + $0x18] sm:$0xf]
      %v265 = vld [vmem:[%s3 + $0x1c] sm:$0xf]
      %v266 = vld [vmem:[%s3 + $0x20] sm:$0xf]
      %v267 = vld [vmem:[%s3 + $0x24] sm:$0xf]
      %v268 = vld [vmem:[%s3 + $0x28] sm:$0xf]
      %v269 = vld [vmem:[%s3 + $0x2c] sm:$0xf]
      %v270 = vld [vmem:[%s3 + $0x30] sm:$0xf]
      %v271 = vld [vmem:[%s3 + $0x34] sm:$0xf]
      %v272 = vld [vmem:[%s3 + $0x38] sm:$0xf]
      %v273 = vld [vmem:[%s3 + $0x3c] sm:$0xf]
      %v290 = vunpack.c.l.b16 %v258
      %v291 = vunpack.c.l.b16 %v259
      %v292 = vunpack.c.l.b16 %v260
      %v293 = vunpack.c.l.b16 %v261
      %v294 = vunpack.c.l.b16 %v262
      %v295 = vunpack.c.l.b16 %v263
      %v296 = vunpack.c.l.b16 %v264
      %v297 = vunpack.c.l.b16 %v265
      %v298 = vunpack.c.l.b16 %v266
      %v299 = vunpack.c.l.b16 %v267
      %v300 = vunpack.c.l.b16 %v268
      %v301 = vunpack.c.l.b16 %v269
      %v302 = vunpack.c.l.b16 %v270
      %v303 = vunpack.c.l.b16 %v271
      %v304 = vunpack.c.l.b16 %v272
      %v305 = vunpack.c.l.b16 %v273
      %v306 = vpack.c.b16 %v291, %v290
      %v307 = vpack.c.b16 %v293, %v292
      %v308 = vpack.c.b16 %v295, %v294
      %v309 = vpack.c.b16 %v297, %v296
      %v310 = vpack.c.b16 %v299, %v298
      %v311 = vpack.c.b16 %v301, %v300
      %v312 = vpack.c.b16 %v303, %v302
      %v313 = vpack.c.b16 %v305, %v304
      %322 = vmatpush.bf16.msra.mxu0 %v313
      %323 = vmatpush.bf16.msra.mxu0 %v312
      %324 = vmatpush.bf16.msra.mxu0 %v311
      %325 = vmatpush.bf16.msra.mxu0 %v310
      %326 = vmatpush.bf16.msra.mxu0 %v309
      %327 = vmatpush.bf16.msra.mxu0 %v308
      %328 = vmatpush.bf16.msra.mxu0 %v307
      %329 = vmatpush.bf16.msra.mxu0 %v306
      %330 = vmatmul.bf16.gmra.mxu0 %v257
      %v331 = vpop.f32.mrf.mxu0
      %v332 = vadd.f32 0.0, %v331
      %v333 = vpop.f32.mrf.mxu0
      %v334 = vadd.f32 0.0, %v333
      %335 = vdwg.mxu0
      %s336 = smul.u32 %s17, 16
      %v337 = vlaneseq
      %v338 = vshrl.u32 %v337, 7
      %v339 = vadd.s32 %v338, 8
      %v340 = vstv %s336
      %v341 = vadd.s32 %v340, %v338
      %v342 = vadd.s32 %v340, %v339
      %vm343 = vcmp.lt.s32.totalorder %v341, 32
      %vm344 = vcmp.lt.s32.totalorder %v342, 32
      %v345 = vsel %vm343, %v332, 0.0
      %v346 = vsel %vm344, %v334, 0.0
      %v347 = vpack.c.bf16 %v345, %v345
      %v348 = vpack.c.bf16 %v346, %v346
      %349 = vst [vmem:[%s233] sm:$0xf] %v347
      %350 = vst [vmem:[%s233 + $0x4] sm:$0xf] %v348
      %v351 = vadd.f32 %v345, %v346
      %v352 = vrot.slane %v351, 4
      %v353 = vadd.f32 %v351, %v352
      %v354 = vrot.slane %v353, 2
      %v355 = vadd.f32 %v353, %v354
      %v356 = vrot.slane %v355, 1
      %v357 = vadd.f32 %v355, %v356
      %v358 = vmul.f32 %v345, %v345
      %v359 = vmul.f32 %v346, %v346
      %v360 = vadd.f32 %v358, %v359
      %v361 = vrot.slane %v360, 4
      %v362 = vadd.f32 %v360, %v361
      %v363 = vrot.slane %v362, 2
      %v364 = vadd.f32 %v362, %v363
      %v365 = vrot.slane %v364, 1
      %v366 = vadd.f32 %v364, %v365
      %vm367 = vcmask 1040384
      %v368 = vsel %vm367, %v357, %v366
      %369 = vst [vmem:[%s238] sm:$0x3] %v368
      %s370 = smul.u32 2, %s17
      %p371 = scmp.lt.s32.totalorder %s370, 3
      %s372 = scalar_select %p371, %s370, 3
      %s373 = smul.addr %s372, 4
      %s374 = scalar_lea.vmem %s4, %s373
      %p375 = scmp.lt.s32.totalorder %s17, 1
      %s376 = scalar_select %p375, %s17, 1
      %s377 = smul.addr %s376, 2
      %s378 = scalar_lea.vmem %s5, %s377
      // Predicated region
      $region37: #{mlp_probe_forward.4} parent=35 // pred_check
        %p379 = pneg %p124
      $region38: #{mlp_probe_forward.4} parent=35 // pred_check_branch
        %381 = sbr.rel (%p379) target = $region40
      $region39: #{mlp_probe_forward.4} parent=35 // pred_region
        %s382 = smul.u32 2, %s17
      $region40: #{mlp_probe_forward.4} parent=35 // pred_fallthru
        _
      // Predicated region
      $region41: #{mlp_probe_forward.4} parent=35 // pred_check
        %p383 = pneg %p150
      $region42: #{mlp_probe_forward.4} parent=35 // pred_check_branch
        %385 = sbr.rel (%p383) target = $region44
      $region43: #{mlp_probe_forward.4} parent=35 // pred_region
        _
      $region44: #{mlp_probe_forward.4} parent=35 // pred_fallthru
        _
    $region36: #{mlp_probe_forward.4} parent=5 // pred_fallthru
      _
    %p386 = scmp.le.s32.totalorder 2, %s12
    // Predicated region
    $region45: #{mlp_probe_forward.4} parent=5 // pred_check
      %p387 = pneg %p386
    $region46: #{mlp_probe_forward.4} parent=5 // pred_check_branch
      %389 = sbr.rel (%p387) target = $region48
    $region47: #{mlp_probe_forward.4} parent=5 // pred_region
      %s390 = ssub.s32 %s12, 2
      // Predicated region
      $region49: #{mlp_probe_forward.4} parent=47 // pred_check
        %p391 = pneg %p130
      $region50: #{mlp_probe_forward.4} parent=47 // pred_check_branch
        %393 = sbr.rel (%p391) target = $region52
      $region51: #{mlp_probe_forward.4} parent=47 // pred_region
        %s394 = smul.u32 2, %s18
        %p395 = scmp.lt.s32.totalorder %s394, 3
        %s396 = scalar_select %p395, %s394, 3
        %s397 = smul.addr %s396, 4
        %s398 = scalar_lea.vmem %s4, %s397
      $region52: #{mlp_probe_forward.4} parent=47 // pred_fallthru
        _
      // Predicated region
      $region53: #{mlp_probe_forward.4} parent=47 // pred_check
        %p399 = pneg %p156
      $region54: #{mlp_probe_forward.4} parent=47 // pred_check_branch
        %401 = sbr.rel (%p399) target = $region56
      $region55: #{mlp_probe_forward.4} parent=47 // pred_region
        %p402 = scmp.lt.s32.totalorder %s18, 1
        %s403 = scalar_select %p402, %s18, 1
        %s404 = smul.addr %s403, 2
        %s405 = scalar_lea.vmem %s5, %s404
      $region56: #{mlp_probe_forward.4} parent=47 // pred_fallthru
        _
    $region48: #{mlp_probe_forward.4} parent=5 // pred_fallthru
      _
  $region6: #{mlp_probe_forward.4} parent=0 // loop_footer
    %s16 = sadd.s32 1, %s12
  $region7: #{mlp_probe_forward.4} parent=0 // loop_footer_branch
    %11 = sbr.rel target = $region3
  $region8: #{mlp_probe_forward.4} parent=0 // loop_exit
    _

// kernel: mlp_probe_forward.3
$region0: #{mlp_probe_forward.3}
  #allocation0 [shape = 'u32[]', space=smem, size = 0x4, offset = 0x4, fixed_abs, tag = 'smem constant byte address 0x4 - core index']
  #allocation1 [shape = 'u32[72,128]{1,0:T(1,128)}', space=vmem, size = 0x9000, scoped, tag = 'internal scratch']
  #allocation2 [shape = 'f32[16,128]{1,0:T(8,128)}', space=vmem, size = 0x2000, scoped, tag = 'scratch operand']
  %s0 = inlined_call_operand.vmem [shape: bf16[32,1024], index: 0, kind: input, shape index: {}]
  %s1 = inlined_call_operand.vmem [shape: bf16[1024,128], index: 1, kind: input, shape index: {}]
  %s2 = inlined_call_operand.vmem [shape: bf16[128,128], index: 2, kind: input, shape index: {}]
  %s3 = inlined_call_operand.vmem [shape: bf16[32,128], index: 3, kind: output, shape index: {0}]
  %s4 = inlined_call_operand.vmem [shape: f32[2,2,128], index: 4, kind: output, shape index: {1}]
  %5 = xla_tuple %s3, %s4
  %s6 = sld [smem:[#allocation0]]
  $region61: #{mlp_probe_forward.3} parent=0
    _
  %s8 = ssub.s32 1, %s6
  %s9 = scalar_select 0, %s8, %s6
  loop: start=0, step=1, limit=4
  $region2: #{mlp_probe_forward.3} parent=0 // loop_pre_header
    _
  $region3: #{mlp_probe_forward.3} parent=0 // loop_header
    %s11 = sphi 0, %s15
    %p12 = scmp.ge.s32.totalorder %s11, 4
    %s18 = sphi 0, %s30
    %s19 = sphi 0, %s26
    %s20 = sphi 0, %s18
    %s21 = sphi 0, %s19
    %s22 = sphi 0, %s20
    %s23 = sphi 0, %s21
    %s35 = sphi 0, %s37
    %s38 = sphi 0, %s35
    %s39 = sphi 0, %s38
    %s55 = sphi 0, %s39
    %s61 = sphi 0, %s63
    %s64 = sphi 0, %s61
    %s65 = sphi 0, %s64
    %s81 = sphi 0, %s65
    %s85 = sphi 0, %s85
    %s87 = sphi 0, %s85
    %s88 = sphi 0, %s87
    %s102 = sphi 0, %s88
    %s108 = sphi 0, %s110
    %s111 = sphi 0, %s108
    %s112 = sphi 0, %s111
    %s128 = sphi 0, %s112
    %s134 = sphi 0, %s136
    %s137 = sphi 0, %s134
    %s138 = sphi 0, %s137
    %s154 = sphi 0, %s138
  $region4: #{mlp_probe_forward.3} parent=0 // loop_header_branch
    %14 = sbr.rel (%p12) target = $region8
  $region5: #{mlp_probe_forward.3} parent=0 // loop_body
    %s16 = ssub.s32 %s11, 1
    %s17 = ssub.s32 %s11, 2
    %s24 = sadd.s32 1, %s19
    %p25 = scmp.ge.s32.totalorder %s24, 1
    %s26 = scalar_select %p25, 0, %s24
    %s27 = sadd.s32 1, %s18
    %s28 = scalar_select %p25, %s27, %s18
    %p29 = scmp.ge.s32.totalorder %s28, 2
    %s30 = scalar_select %p29, 0, %s28
    %s31 = ssub.s32 %s18, %s30
    %s32 = ssub.s32 %s19, %s26
    %s33 = sor.u32 %s31, %s32
    %p34 = scmp.eq.s32.totalorder %s33, 0
    %s36 = sadd.s32 %s35, 1
    %s37 = scalar_select %p34, %s35, %s36
    %p40 = pneg %p34
    %p41 = scmp.eq.s32.totalorder %s11, 1
    %p42 = por %p40, %p41
    %p43 = scmp.ne.s32.totalorder %s35, %s38
    %p44 = scmp.eq.s32.totalorder %s11, 0
    %p45 = por %p43, %p44
    %p46 = scmp.ne.s32.totalorder %s35, %s38
    %p47 = scmp.eq.s32.totalorder %s16, 1
    %p48 = por %p46, %p47
    %p49 = scmp.ne.s32.totalorder %s38, %s39
    %p50 = scmp.eq.s32.totalorder %s16, 0
    %p51 = por %p49, %p50
    %p52 = scmp.ne.s32.totalorder %s38, %s39
    %p53 = scmp.eq.s32.totalorder %s17, 1
    %p54 = por %p52, %p53
    %p56 = scmp.ne.s32.totalorder %s39, %s55
    %p57 = scmp.eq.s32.totalorder %s17, 0
    %p58 = por %p56, %p57
    %s59 = ssub.s32 %s19, %s26
    %p60 = scmp.eq.s32.totalorder %s59, 0
    %s62 = sadd.s32 %s61, 1
    %s63 = scalar_select %p60, %s61, %s62
    %p66 = pneg %p60
    %p67 = scmp.eq.s32.totalorder %s11, 1
    %p68 = por %p66, %p67
    %p69 = scmp.ne.s32.totalorder %s61, %s64
    %p70 = scmp.eq.s32.totalorder %s11, 0
    %p71 = por %p69, %p70
    %p72 = scmp.ne.s32.totalorder %s61, %s64
    %p73 = scmp.eq.s32.totalorder %s16, 1
    %p74 = por %p72, %p73
    %p75 = scmp.ne.s32.totalorder %s64, %s65
    %p76 = scmp.eq.s32.totalorder %s16, 0
    %p77 = por %p75, %p76
    %p78 = scmp.ne.s32.totalorder %s64, %s65
    %p79 = scmp.eq.s32.totalorder %s17, 1
    %p80 = por %p78, %p79
    %p82 = scmp.ne.s32.totalorder %s65, %s81
    %p83 = scmp.eq.s32.totalorder %s17, 0
    %p84 = por %p82, %p83
    %s86 = sadd.s32 %s85, 1
    %p89 = scmp.eq.s32.totalorder %s11, 1
    %p90 = scmp.ne.s32.totalorder %s85, %s87
    %p91 = scmp.eq.s32.totalorder %s11, 0
    %p92 = por %p90, %p91
    %p93 = scmp.ne.s32.totalorder %s85, %s87
    %p94 = scmp.eq.s32.totalorder %s16, 1
    %p95 = por %p93, %p94
    %p96 = scmp.ne.s32.totalorder %s87, %s88
    %p97 = scmp.eq.s32.totalorder %s16, 0
    %p98 = por %p96, %p97
    %p99 = scmp.ne.s32.totalorder %s87, %s88
    %p100 = scmp.eq.s32.totalorder %s17, 1
    %p101 = por %p99, %p100
    %p103 = scmp.ne.s32.totalorder %s88, %s102
    %p104 = scmp.eq.s32.totalorder %s17, 0
    %p105 = por %p103, %p104
    %s106 = ssub.s32 %s18, %s30
    %p107 = scmp.eq.s32.totalorder %s106, 0
    %s109 = sadd.s32 %s108, 1
    %s110 = scalar_select %p107, %s108, %s109
    %p113 = pneg %p107
    %p114 = scmp.eq.s32.totalorder %s11, 1
    %p115 = por %p113, %p114
    %p116 = scmp.ne.s32.totalorder %s108, %s111
    %p117 = scmp.eq.s32.totalorder %s11, 0
    %p118 = por %p116, %p117
    %p119 = scmp.ne.s32.totalorder %s108, %s111
    %p120 = scmp.eq.s32.totalorder %s16, 1
    %p121 = por %p119, %p120
    %p122 = scmp.ne.s32.totalorder %s111, %s112
    %p123 = scmp.eq.s32.totalorder %s16, 0
    %p124 = por %p122, %p123
    %p125 = scmp.ne.s32.totalorder %s111, %s112
    %p126 = scmp.eq.s32.totalorder %s17, 1
    %p127 = por %p125, %p126
    %p129 = scmp.ne.s32.totalorder %s112, %s128
    %p130 = scmp.eq.s32.totalorder %s17, 0
    %p131 = por %p129, %p130
    %s132 = ssub.s32 %s18, %s30
    %p133 = scmp.eq.s32.totalorder %s132, 0
    %s135 = sadd.s32 %s134, 1
    %s136 = scalar_select %p133, %s134, %s135
    %p139 = pneg %p133
    %p140 = scmp.eq.s32.totalorder %s11, 1
    %p141 = por %p139, %p140
    %p142 = scmp.ne.s32.totalorder %s134, %s137
    %p143 = scmp.eq.s32.totalorder %s11, 0
    %p144 = por %p142, %p143
    %p145 = scmp.ne.s32.totalorder %s134, %s137
    %p146 = scmp.eq.s32.totalorder %s16, 1
    %p147 = por %p145, %p146
    %p148 = scmp.ne.s32.totalorder %s137, %s138
    %p149 = scmp.eq.s32.totalorder %s16, 0
    %p150 = por %p148, %p149
    %p151 = scmp.ne.s32.totalorder %s137, %s138
    %p152 = scmp.eq.s32.totalorder %s17, 1
    %p153 = por %p151, %p152
    %p155 = scmp.ne.s32.totalorder %s138, %s154
    %p156 = scmp.eq.s32.totalorder %s17, 0
    %p157 = por %p155, %p156
    %p158 = scmp.le.s32.totalorder 1, %s11
    %p159 = scmp.lt.s32.totalorder %s11, 3
    %p160 = pnand %p158, %p159
    %p161 = pneg %p160
    // Predicated region
    $region9: #{mlp_probe_forward.3} parent=5 // pred_check
      _
    $region10: #{mlp_probe_forward.3} parent=5 // pred_check_branch
      %163 = sbr.rel (%p160) target = $region12
    $region11: #{mlp_probe_forward.3} parent=5 // pred_region
      %s164 = ssub.s32 %s11, 1
      // Predicated region
      $region13: #{mlp_probe_forward.3} parent=11 // pred_check
        %p165 = pneg %p77
      $region14: #{mlp_probe_forward.3} parent=11 // pred_check_branch
        %167 = sbr.rel (%p165) target = $region16
      $region15: #{mlp_probe_forward.3} parent=11 // pred_region
        %s168 = smul.u32 128, %s21
        %p169 = scmp.lt.s32.totalorder %s168, 127
        %s170 = scalar_select %p169, %s168, 127
        %s171 = smul.addr %s170, 4
        %s172 = scalar_lea.vmem %s1, %s171
        %s173 = smul.u32 128, %s21
      $region16: #{mlp_probe_forward.3} parent=11 // pred_fallthru
        _
      // Predicated region
      $region17: #{mlp_probe_forward.3} parent=11 // pred_check
        %p174 = pneg %p98
      $region18: #{mlp_probe_forward.3} parent=11 // pred_check_branch
        %176 = sbr.rel (%p174) target = $region20
      $region19: #{mlp_probe_forward.3} parent=11 // pred_region
        _
      $region20: #{mlp_probe_forward.3} parent=11 // pred_fallthru
        _
    $region12: #{mlp_probe_forward.3} parent=5 // pred_fallthru
      _
    %p177 = scmp.lt.s32.totalorder %s11, 2
    // Predicated region
    $region21: #{mlp_probe_forward.3} parent=5 // pred_check
      %p178 = pneg %p177
    $region22: #{mlp_probe_forward.3} parent=5 // pred_check_branch
      %180 = sbr.rel (%p178) target = $region24
    $region23: #{mlp_probe_forward.3} parent=5 // pred_region
      // Predicated region
      $region25: #{mlp_probe_forward.3} parent=23 // pred_check
        %p181 = pneg %p45
      $region26: #{mlp_probe_forward.3} parent=23 // pred_check_branch
        %183 = sbr.rel (%p181) target = $region28
      $region27: #{mlp_probe_forward.3} parent=23 // pred_region
        %s184 = smul.u32 2, %s18
        %s185 = smul.u32 8, %s19
        %p186 = scmp.lt.s32.totalorder %s184, 3
        %s187 = scalar_select %p186, %s184, 3
        %p188 = scmp.lt.s32.totalorder %s185, 7
        %s189 = scalar_select %p188, %s185, 7
        %s190 = smul.addr %s187, 8
        %s191 = sadd.s32 %s189, %s190
        %s192 = smul.addr %s191, 4
        %s193 = scalar_lea.vmem %s0, %s192
        %s194 = smul.u32 2, %s18
        %s195 = smul.u32 8, %s19
      $region28: #{mlp_probe_forward.3} parent=23 // pred_fallthru
        _
    $region24: #{mlp_probe_forward.3} parent=5 // pred_fallthru
      _
    %p196 = scmp.le.s32.totalorder 1, %s11
    %p197 = scmp.lt.s32.totalorder %s11, 3
    %p198 = pnand %p196, %p197
    %p199 = pneg %p198
    // Predicated region
    $region29: #{mlp_probe_forward.3} parent=5 // pred_check
      _
    $region30: #{mlp_probe_forward.3} parent=5 // pred_check_branch
      %201 = sbr.rel (%p198) target = $region32
    $region31: #{mlp_probe_forward.3} parent=5 // pred_region
      %s202 = ssub.s32 %s11, 1
      %s203 = smul.u32 2, %s20
      %s204 = smul.u32 8, %s21
      %p205 = scmp.lt.s32.totalorder %s203, 3
      %s206 = scalar_select %p205, %s203, 3
      %p207 = scmp.lt.s32.totalorder %s204, 7
      %s208 = scalar_select %p207, %s204, 7
      %s209 = smul.addr %s206, 8
      %s210 = sadd.s32 %s208, %s209
      %s211 = smul.addr %s210, 4
      %s212 = scalar_lea.vmem %s0, %s211
      %p213 = pneg %p51
      %p214 = pneg %p48
      %s215 = smul.u32 128, %s21
      %p216 = scmp.lt.s32.totalorder %s215, 127
      %s217 = scalar_select %p216, %s215, 127
      %s218 = smul.addr %s217, 4
      %s219 = scalar_lea.vmem %s1, %s218
      %p220 = pneg %p77
      %p221 = pneg %p74
      %p222 = pneg %p98
      %p223 = pneg %p95
      %p224 = pneg %p124
      %p225 = pneg %p121
      %s226 = smul.u32 2, %s20
      %p227 = scmp.lt.s32.totalorder %s226, 3
      %s228 = scalar_select %p227, %s226, 3
      %s229 = smul.addr %s228, 4
      %s230 = scalar_lea.vmem %s3, %s229
      %p231 = pneg %p150
      %p232 = pneg %p147
      %p233 = scmp.lt.s32.totalorder %s20, 1
      %s234 = scalar_select %p233, %s20, 1
      %s235 = smul.addr %s234, 2
      %s236 = scalar_lea.vmem %s4, %s235
      %s237 = smul.u32 2, %s20
      %s238 = smul.u32 8, %s21
      %p239 = scmp.lt.s32.totalorder %s237, 3
      %s240 = scalar_select %p239, %s237, 3
      %p241 = scmp.lt.s32.totalorder %s238, 7
      %s242 = scalar_select %p241, %s238, 7
      %s243 = smul.addr %s240, 8
      %s244 = sadd.s32 %s242, %s243
      %s245 = smul.addr %s244, 4
      %s246 = scalar_lea.vmem %s0, %s245
      %s247 = smul.u32 2, %s20
      %s248 = smul.u32 8, %s21
      %s249 = smul.u32 128, %s21
      %p250 = scmp.lt.s32.totalorder %s249, 127
      %s251 = scalar_select %p250, %s249, 127
      %s252 = smul.addr %s251, 4
      %s253 = scalar_lea.vmem %s1, %s252
      %s254 = smul.u32 128, %s21
      %s255 = smul.u32 2, %s20
      %p256 = scmp.lt.s32.totalorder %s255, 3
      %s257 = scalar_select %p256, %s255, 3
      %s258 = smul.addr %s257, 4
      %s259 = scalar_lea.vmem %s3, %s258
      %s260 = smul.u32 2, %s20
      %p261 = scmp.lt.s32.totalorder %s20, 1
      %s262 = scalar_select %p261, %s20, 1
      %s263 = smul.addr %s262, 2
      %s264 = scalar_lea.vmem %s4, %s263
      %p265 = scmp.eq.s32.totalorder %s21, 0
      // Predicated region
      $region33: #{mlp_probe_forward.3} parent=31 // pred_check
        %p266 = pneg %p265
      $region34: #{mlp_probe_forward.3} parent=31 // pred_check_branch
        %268 = sbr.rel (%p266) target = $region36
      $region35: #{mlp_probe_forward.3} parent=31 // pred_region
        %269 = vst [vmem:[#allocation2] sm:$0xff] 0.0
        %270 = vst [vmem:[#allocation2 + $0x8] sm:$0xff] 0.0
      $region36: #{mlp_probe_forward.3} parent=31 // pred_fallthru
        _
      %v271 = vld [vmem:[#allocation2] sm:$0xff]
      %v272 = vld [vmem:[#allocation2 + $0x8] sm:$0xff]
      %v273 = vld [vmem:[%s246] sm:$0xff]
      %v274 = vld [vmem:[%s246 + $0x8] sm:$0xff]
      %v275 = vld [vmem:[%s246 + $0x10] sm:$0xff]
      %v276 = vld [vmem:[%s246 + $0x18] sm:$0xff]
      %v277 = vld [vmem:[%s246 + $0x20] sm:$0xff]
      %v278 = vld [vmem:[%s246 + $0x28] sm:$0xff]
      %v279 = vld [vmem:[%s246 + $0x30] sm:$0xff]
      %v280 = vld [vmem:[%s246 + $0x38] sm:$0xff]
      %v281 = vld [vmem:[%s253] sm:$0xf]
      %v282 = vld [vmem:[%s253 + $0x4] sm:$0xf]
      %v283 = vld [vmem:[%s253 + $0x8] sm:$0xf]
      %v284 = vld [vmem:[%s253 + $0xc] sm:$0xf]
      %v285 = vld [vmem:[%s253 + $0x10] sm:$0xf]
      %v286 = vld [vmem:[%s253 + $0x14] sm:$0xf]
      %v287 = vld [vmem:[%s253 + $0x18] sm:$0xf]
      %v288 = vld [vmem:[%s253 + $0x1c] sm:$0xf]
      %v289 = vld [vmem:[%s253 + $0x20] sm:$0xf]
      %v290 = vld [vmem:[%s253 + $0x24] sm:$0xf]
      %v291 = vld [vmem:[%s253 + $0x28] sm:$0xf]
      %v292 = vld [vmem:[%s253 + $0x2c] sm:$0xf]
      %v293 = vld [vmem:[%s253 + $0x30] sm:$0xf]
      %v294 = vld [vmem:[%s253 + $0x34] sm:$0xf]
      %v295 = vld [vmem:[%s253 + $0x38] sm:$0xf]
      %v296 = vld [vmem:[%s253 + $0x3c] sm:$0xf]
      %v297 = vld [vmem:[%s253 + $0x40] sm:$0xf]
      %v298 = vld [vmem:[%s253 + $0x44] sm:$0xf]
      %v299 = vld [vmem:[%s253 + $0x48] sm:$0xf]
      %v300 = vld [vmem:[%s253 + $0x4c] sm:$0xf]
      %v301 = vld [vmem:[%s253 + $0x50] sm:$0xf]
      %v302 = vld [vmem:[%s253 + $0x54] sm:$0xf]
      %v303 = vld [vmem:[%s253 + $0x58] sm:$0xf]
      %v304 = vld [vmem:[%s253 + $0x5c] sm:$0xf]
      %v305 = vld [vmem:[%s253 + $0x60] sm:$0xf]
      %v306 = vld [vmem:[%s253 + $0x64] sm:$0xf]
      %v307 = vld [vmem:[%s253 + $0x68] sm:$0xf]
      %v308 = vld [vmem:[%s253 + $0x6c] sm:$0xf]
      %v309 = vld [vmem:[%s253 + $0x70] sm:$0xf]
      %v310 = vld [vmem:[%s253 + $0x74] sm:$0xf]
      %v311 = vld [vmem:[%s253 + $0x78] sm:$0xf]
      %v312 = vld [vmem:[%s253 + $0x7c] sm:$0xf]
      %v313 = vld [vmem:[%s253 + $0x80] sm:$0xf]
      %v314 = vld [vmem:[%s253 + $0x84] sm:$0xf]
      %v315 = vld [vmem:[%s253 + $0x88] sm:$0xf]
      %v316 = vld [vmem:[%s253 + $0x8c] sm:$0xf]
      %v317 = vld [vmem:[%s253 + $0x90] sm:$0xf]
      %v318 = vld [vmem:[%s253 + $0x94] sm:$0xf]
      %v319 = vld [vmem:[%s253 + $0x98] sm:$0xf]
      %v320 = vld [vmem:[%s253 + $0x9c] sm:$0xf]
      %v321 = vld [vmem:[%s253 + $0xa0] sm:$0xf]
      %v322 = vld [vmem:[%s253 + $0xa4] sm:$0xf]
      %v323 = vld [vmem:[%s253 + $0xa8] sm:$0xf]
      %v324 = vld [vmem:[%s253 + $0xac] sm:$0xf]
      %v325 = vld [vmem:[%s253 + $0xb0] sm:$0xf]
      %v326 = vld [vmem:[%s253 + $0xb4] sm:$0xf]
      %v327 = vld [vmem:[%s253 + $0xb8] sm:$0xf]
      %v328 = vld [vmem:[%s253 + $0xbc] sm:$0xf]
      %v329 = vld [vmem:[%s253 + $0xc0] sm:$0xf]
      %v330 = vld [vmem:[%s253 + $0xc4] sm:$0xf]
      %v331 = vld [vmem:[%s253 + $0xc8] sm:$0xf]
      %v332 = vld [vmem:[%s253 + $0xcc] sm:$0xf]
      %v333 = vld [vmem:[%s253 + $0xd0] sm:$0xf]
      %v334 = vld [vmem:[%s253 + $0xd4] sm:$0xf]
      %v335 = vld [vmem:[%s253 + $0xd8] sm:$0xf]
      %v336 = vld [vmem:[%s253 + $0xdc] sm:$0xf]
      %v337 = vld [vmem:[%s253 + $0xe0] sm:$0xf]
      %v338 = vld [vmem:[%s253 + $0xe4] sm:$0xf]
      %v339 = vld [vmem:[%s253 + $0xe8] sm:$0xf]
      %v340 = vld [vmem:[%s253 + $0xec] sm:$0xf]
      %v341 = vld [vmem:[%s253 + $0xf0] sm:$0xf]
      %v342 = vld [vmem:[%s253 + $0xf4] sm:$0xf]
      %v343 = vld [vmem:[%s253 + $0xf8] sm:$0xf]
      %v344 = vld [vmem:[%s253 + $0xfc] sm:$0xf]
      %v345 = vld [vmem:[%s253 + $0x100] sm:$0xf]
      %v346 = vld [vmem:[%s253 + $0x104] sm:$0xf]
      %v347 = vld [vmem:[%s253 + $0x108] sm:$0xf]
      %v348 = vld [vmem:[%s253 + $0x10c] sm:$0xf]
      %v349 = vld [vmem:[%s253 + $0x110] sm:$0xf]
      %v350 = vld [vmem:[%s253 + $0x114] sm:$0xf]
      %v351 = vld [vmem:[%s253 + $0x118] sm:$0xf]
      %v352 = vld [vmem:[%s253 + $0x11c] sm:$0xf]
      %v353 = vld [vmem:[%s253 + $0x120] sm:$0xf]
      %v354 = vld [vmem:[%s253 + $0x124] sm:$0xf]
      %v355 = vld [vmem:[%s253 + $0x128] sm:$0xf]
      %v356 = vld [vmem:[%s253 + $0x12c] sm:$0xf]
      %v357 = vld [vmem:[%s253 + $0x130] sm:$0xf]
      %v358 = vld [vmem:[%s253 + $0x134] sm:$0xf]
      %v359 = vld [vmem:[%s253 + $0x138] sm:$0xf]
      %v360 = vld [vmem:[%s253 + $0x13c] sm:$0xf]
      %v361 = vld [vmem:[%s253 + $0x140] sm:$0xf]
      %v362 = vld [vmem:[%s253 + $0x144] sm:$0xf]
      %v363 = vld [vmem:[%s253 + $0x148] sm:$0xf]
      %v364 = vld [vmem:[%s253 + $0x14c] sm:$0xf]
      %v365 = vld [vmem:[%s253 + $0x150] sm:$0xf]
      %v366 = vld [vmem:[%s253 + $0x154] sm:$0xf]
      %v367 = vld [vmem:[%s253 + $0x158] sm:$0xf]
      %v368 = vld [vmem:[%s253 + $0x15c] sm:$0xf]
      %v369 = vld [vmem:[%s253 + $0x160] sm:$0xf]
      %v370 = vld [vmem:[%s253 + $0x164] sm:$0xf]
      %v371 = vld [vmem:[%s253 + $0x168] sm:$0xf]
      %v372 = vld [vmem:[%s253 + $0x16c] sm:$0xf]
      %v373 = vld [vmem:[%s253 + $0x170] sm:$0xf]
      %v374 = vld [vmem:[%s253 + $0x174] sm:$0xf]
      %v375 = vld [vmem:[%s253 + $0x178] sm:$0xf]
      %v376 = vld [vmem:[%s253 + $0x17c] sm:$0xf]
      %v377 = vld [vmem:[%s253 + $0x180] sm:$0xf]
      %v378 = vld [vmem:[%s253 + $0x184] sm:$0xf]
      %v379 = vld [vmem:[%s253 + $0x188] sm:$0xf]
      %v380 = vld [vmem:[%s253 + $0x18c] sm:$0xf]
      %v381 = vld [vmem:[%s253 + $0x190] sm:$0xf]
      %v382 = vld [vmem:[%s253 + $0x194] sm:$0xf]
      %v383 = vld [vmem:[%s253 + $0x198] sm:$0xf]
      %v384 = vld [vmem:[%s253 + $0x19c] sm:$0xf]
      %v385 = vld [vmem:[%s253 + $0x1a0] sm:$0xf]
      %v386 = vld [vmem:[%s253 + $0x1a4] sm:$0xf]
      %v387 = vld [vmem:[%s253 + $0x1a8] sm:$0xf]
      %v388 = vld [vmem:[%s253 + $0x1ac] sm:$0xf]
      %v389 = vld [vmem:[%s253 + $0x1b0] sm:$0xf]
      %v390 = vld [vmem:[%s253 + $0x1b4] sm:$0xf]
      %v391 = vld [vmem:[%s253 + $0x1b8] sm:$0xf]
      %v392 = vld [vmem:[%s253 + $0x1bc] sm:$0xf]
      %v393 = vld [vmem:[%s253 + $0x1c0] sm:$0xf]
      %v394 = vld [vmem:[%s253 + $0x1c4] sm:$0xf]
      %v395 = vld [vmem:[%s253 + $0x1c8] sm:$0xf]
      %v396 = vld [vmem:[%s253 + $0x1cc] sm:$0xf]
      %v397 = vld [vmem:[%s253 + $0x1d0] sm:$0xf]
      %v398 = vld [vmem:[%s253 + $0x1d4] sm:$0xf]
      %v399 = vld [vmem:[%s253 + $0x1d8] sm:$0xf]
      %v400 = vld [vmem:[%s253 + $0x1dc] sm:$0xf]
      %v401 = vld [vmem:[%s253 + $0x1e0] sm:$0xf]
      %v402 = vld [vmem:[%s253 + $0x1e4] sm:$0xf]
      %v403 = vld [vmem:[%s253 + $0x1e8] sm:$0xf]
      %v404 = vld [vmem:[%s253 + $0x1ec] sm:$0xf]
      %v405 = vld [vmem:[%s253 + $0x1f0] sm:$0xf]
      %v406 = vld [vmem:[%s253 + $0x1f4] sm:$0xf]
      %v407 = vld [vmem:[%s253 + $0x1f8] sm:$0xf]
      %v408 = vld [vmem:[%s253 + $0x1fc] sm:$0xf]
      %v417 = vunpack.c.l.b16 %v273
      %v418 = vunpack.c.h.b16 %v273
      %v419 = vunpack.c.l.b16 %v274
      %v420 = vunpack.c.h.b16 %v274
      %v421 = vunpack.c.l.b16 %v275
      %v422 = vunpack.c.h.b16 %v275
      %v423 = vunpack.c.l.b16 %v276
      %v424 = vunpack.c.h.b16 %v276
      %v425 = vunpack.c.l.b16 %v277
      %v426 = vunpack.c.h.b16 %v277
      %v427 = vunpack.c.l.b16 %v278
      %v428 = vunpack.c.h.b16 %v278
      %v429 = vunpack.c.l.b16 %v279
      %v430 = vunpack.c.h.b16 %v279
      %v431 = vunpack.c.l.b16 %v280
      %v432 = vunpack.c.h.b16 %v280
      %v433 = vpack.c.b16 %v425, %v417
      %v434 = vpack.c.b16 %v426, %v418
      %v435 = vpack.c.b16 %v427, %v419
      %v436 = vpack.c.b16 %v428, %v420
      %v437 = vpack.c.b16 %v429, %v421
      %v438 = vpack.c.b16 %v430, %v422
      %v439 = vpack.c.b16 %v431, %v423
      %v440 = vpack.c.b16 %v432, %v424
      %v577 = vunpack.c.l.b16 %v281
      %v578 = vunpack.c.l.b16 %v282
      %v579 = vunpack.c.l.b16 %v283
      %v580 = vunpack.c.l.b16 %v284
      %v581 = vunpack.c.l.b16 %v285
      %v582 = vunpack.c.l.b16 %v286
      %v583 = vunpack.c.l.b16 %v287
      %v584 = vunpack.c.l.b16 %v288
      %v585 = vunpack.c.l.b16 %v289
      %v586 = vunpack.c.l.b16 %v290
      %v587 = vunpack.c.l.b16 %v291
      %v588 = vunpack.c.l.b16 %v292
      %v589 = vunpack.c.l.b16 %v293
      %v590 = vunpack.c.l.b16 %v294
      %v591 = vunpack.c.l.b16 %v295
      %v592 = vunpack.c.l.b16 %v296
      %v593 = vunpack.c.l.b16 %v297
      %v594 = vunpack.c.l.b16 %v298
      %v595 = vunpack.c.l.b16 %v299
      %v596 = vunpack.c.l.b16 %v300
      %v597 = vunpack.c.l.b16 %v301
      %v598 = vunpack.c.l.b16 %v302
      %v599 = vunpack.c.l.b16 %v303
      %v600 = vunpack.c.l.b16 %v304
      %v601 = vunpack.c.l.b16 %v305
      %v602 = vunpack.c.l.b16 %v306
      %v603 = vunpack.c.l.b16 %v307
      %v604 = vunpack.c.l.b16 %v308
      %v605 = vunpack.c.l.b16 %v309
      %v606 = vunpack.c.l.b16 %v310
      %v607 = vunpack.c.l.b16 %v311
      %v608 = vunpack.c.l.b16 %v312
      %v609 = vunpack.c.l.b16 %v313
      %v610 = vunpack.c.l.b16 %v314
      %v611 = vunpack.c.l.b16 %v315
      %v612 = vunpack.c.l.b16 %v316
      %v613 = vunpack.c.l.b16 %v317
      %v614 = vunpack.c.l.b16 %v318
      %v615 = vunpack.c.l.b16 %v319
      %v616 = vunpack.c.l.b16 %v320
      %v617 = vunpack.c.l.b16 %v321
      %v618 = vunpack.c.l.b16 %v322
      %v619 = vunpack.c.l.b16 %v323
      %v620 = vunpack.c.l.b16 %v324
      %v621 = vunpack.c.l.b16 %v325
      %v622 = vunpack.c.l.b16 %v326
      %v623 = vunpack.c.l.b16 %v327
      %v624 = vunpack.c.l.b16 %v328
      %v625 = vunpack.c.l.b16 %v329
      %v626 = vunpack.c.l.b16 %v330
      %v627 = vunpack.c.l.b16 %v331
      %v628 = vunpack.c.l.b16 %v332
      %v629 = vunpack.c.l.b16 %v333
      %v630 = vunpack.c.l.b16 %v334
      %v631 = vunpack.c.l.b16 %v335
      %v632 = vunpack.c.l.b16 %v336
      %v633 = vunpack.c.l.b16 %v337
      %v634 = vunpack.c.l.b16 %v338
      %v635 = vunpack.c.l.b16 %v339
      %v636 = vunpack.c.l.b16 %v340
      %v637 = vunpack.c.l.b16 %v341
      %v638 = vunpack.c.l.b16 %v342
      %v639 = vunpack.c.l.b16 %v343
      %v640 = vunpack.c.l.b16 %v344
      %v641 = vunpack.c.l.b16 %v345
      %v642 = vunpack.c.l.b16 %v346
      %v643 = vunpack.c.l.b16 %v347
      %v644 = vunpack.c.l.b16 %v348
      %v645 = vunpack.c.l.b16 %v349
      %v646 = vunpack.c.l.b16 %v350
      %v647 = vunpack.c.l.b16 %v351
      %v648 = vunpack.c.l.b16 %v352
      %v649 = vunpack.c.l.b16 %v353
      %v650 = vunpack.c.l.b16 %v354
      %v651 = vunpack.c.l.b16 %v355
      %v652 = vunpack.c.l.b16 %v356
      %v653 = vunpack.c.l.b16 %v357
      %v654 = vunpack.c.l.b16 %v358
      %v655 = vunpack.c.l.b16 %v359
      %v656 = vunpack.c.l.b16 %v360
      %v657 = vunpack.c.l.b16 %v361
      %v658 = vunpack.c.l.b16 %v362
      %v659 = vunpack.c.l.b16 %v363
      %v660 = vunpack.c.l.b16 %v364
      %v661 = vunpack.c.l.b16 %v365
      %v662 = vunpack.c.l.b16 %v366
      %v663 = vunpack.c.l.b16 %v367
      %v664 = vunpack.c.l.b16 %v368
      %v665 = vunpack.c.l.b16 %v369
      %v666 = vunpack.c.l.b16 %v370
      %v667 = vunpack.c.l.b16 %v371
      %v668 = vunpack.c.l.b16 %v372
      %v669 = vunpack.c.l.b16 %v373
      %v670 = vunpack.c.l.b16 %v374
      %v671 = vunpack.c.l.b16 %v375
      %v672 = vunpack.c.l.b16 %v376
      %v673 = vunpack.c.l.b16 %v377
      %v674 = vunpack.c.l.b16 %v378
      %v675 = vunpack.c.l.b16 %v379
      %v676 = vunpack.c.l.b16 %v380
      %v677 = vunpack.c.l.b16 %v381
      %v678 = vunpack.c.l.b16 %v382
      %v679 = vunpack.c.l.b16 %v383
      %v680 = vunpack.c.l.b16 %v384
      %v681 = vunpack.c.l.b16 %v385
      %v682 = vunpack.c.l.b16 %v386
      %v683 = vunpack.c.l.b16 %v387
      %v684 = vunpack.c.l.b16 %v388
      %v685 = vunpack.c.l.b16 %v389
      %v686 = vunpack.c.l.b16 %v390
      %v687 = vunpack.c.l.b16 %v391
      %v688 = vunpack.c.l.b16 %v392
      %v689 = vunpack.c.l.b16 %v393
      %v690 = vunpack.c.l.b16 %v394
      %v691 = vunpack.c.l.b16 %v395
      %v692 = vunpack.c.l.b16 %v396
      %v693 = vunpack.c.l.b16 %v397
      %v694 = vunpack.c.l.b16 %v398
      %v695 = vunpack.c.l.b16 %v399
      %v696 = vunpack.c.l.b16 %v400
      %v697 = vunpack.c.l.b16 %v401
      %v698 = vunpack.c.l.b16 %v402
      %v699 = vunpack.c.l.b16 %v403
      %v700 = vunpack.c.l.b16 %v404
      %v701 = vunpack.c.l.b16 %v405
      %v702 = vunpack.c.l.b16 %v406
      %v703 = vunpack.c.l.b16 %v407
      %v704 = vunpack.c.l.b16 %v408
      %v705 = vpack.c.b16 %v578, %v577
      %v706 = vpack.c.b16 %v580, %v579
      %v707 = vpack.c.b16 %v582, %v581
      %v708 = vpack.c.b16 %v584, %v583
      %v709 = vpack.c.b16 %v586, %v585
      %v710 = vpack.c.b16 %v588, %v587
      %v711 = vpack.c.b16 %v590, %v589
      %v712 = vpack.c.b16 %v592, %v591
      %v713 = vpack.c.b16 %v594, %v593
      %v714 = vpack.c.b16 %v596, %v595
      %v715 = vpack.c.b16 %v598, %v597
      %v716 = vpack.c.b16 %v600, %v599
      %v717 = vpack.c.b16 %v602, %v601
      %v718 = vpack.c.b16 %v604, %v603
      %v719 = vpack.c.b16 %v606, %v605
      %v720 = vpack.c.b16 %v608, %v607
      %v721 = vpack.c.b16 %v610, %v609
      %v722 = vpack.c.b16 %v612, %v611
      %v723 = vpack.c.b16 %v614, %v613
      %v724 = vpack.c.b16 %v616, %v615
      %v725 = vpack.c.b16 %v618, %v617
      %v726 = vpack.c.b16 %v620, %v619
      %v727 = vpack.c.b16 %v622, %v621
      %v728 = vpack.c.b16 %v624, %v623
      %v729 = vpack.c.b16 %v626, %v625
      %v730 = vpack.c.b16 %v628, %v627
      %v731 = vpack.c.b16 %v630, %v629
      %v732 = vpack.c.b16 %v632, %v631
      %v733 = vpack.c.b16 %v634, %v633
      %v734 = vpack.c.b16 %v636, %v635
      %v735 = vpack.c.b16 %v638, %v637
      %v736 = vpack.c.b16 %v640, %v639
      %v737 = vpack.c.b16 %v642, %v641
      %v738 = vpack.c.b16 %v644, %v643
      %v739 = vpack.c.b16 %v646, %v645
      %v740 = vpack.c.b16 %v648, %v647
      %v741 = vpack.c.b16 %v650, %v649
      %v742 = vpack.c.b16 %v652, %v651
      %v743 = vpack.c.b16 %v654, %v653
      %v744 = vpack.c.b16 %v656, %v655
      %v745 = vpack.c.b16 %v658, %v657
      %v746 = vpack.c.b16 %v660, %v659
      %v747 = vpack.c.b16 %v662, %v661
      %v748 = vpack.c.b16 %v664, %v663
      %v749 = vpack.c.b16 %v666, %v665
      %v750 = vpack.c.b16 %v668, %v667
      %v751 = vpack.c.b16 %v670, %v669
      %v752 = vpack.c.b16 %v672, %v671
      %v753 = vpack.c.b16 %v674, %v673
      %v754 = vpack.c.b16 %v676, %v675
      %v755 = vpack.c.b16 %v678, %v677
      %v756 = vpack.c.b16 %v680, %v679
      %v757 = vpack.c.b16 %v682, %v681
      %v758 = vpack.c.b16 %v684, %v683
      %v759 = vpack.c.b16 %v686, %v685
      %v760 = vpack.c.b16 %v688, %v687
      %v761 = vpack.c.b16 %v690, %v689
      %v762 = vpack.c.b16 %v692, %v691
      %v763 = vpack.c.b16 %v694, %v693
      %v764 = vpack.c.b16 %v696, %v695
      %v765 = vpack.c.b16 %v698, %v697
      %v766 = vpack.c.b16 %v700, %v699
      %v767 = vpack.c.b16 %v702, %v701
      %v768 = vpack.c.b16 %v704, %v703
      %833 = vmatpush.bf16.msra.mxu0 %v712
      %834 = vmatpush.bf16.msra.mxu0 %v711
      %835 = vmatpush.bf16.msra.mxu0 %v710
      %836 = vmatpush.bf16.msra.mxu0 %v709
      %837 = vmatpush.bf16.msra.mxu0 %v708
      %838 = vmatpush.bf16.msra.mxu0 %v707
      %839 = vmatpush.bf16.msra.mxu0 %v706
      %840 = vmatpush.bf16.msra.mxu0 %v705
      %841 = vmatmul.bf16.gmra.mxu0 %v433
      %v842 = vpop.f32.mrf.mxu0
      %v843 = vadd.f32 0.0, %v842
      %v844 = vpop.f32.mrf.mxu0
      %v845 = vadd.f32 0.0, %v844
      %846 = vdwg.mxu0
      %847 = vmatpush.bf16.msra.mxu0 %v720
      %848 = vmatpush.bf16.msra.mxu0 %v719
      %849 = vmatpush.bf16.msra.mxu0 %v718
      %850 = vmatpush.bf16.msra.mxu0 %v717
      %851 = vmatpush.bf16.msra.mxu0 %v716
      %852 = vmatpush.bf16.msra.mxu0 %v715
      %853 = vmatpush.bf16.msra.mxu0 %v714
      %854 = vmatpush.bf16.msra.mxu0 %v713
      %855 = vmatmul.bf16.gmra.mxu0 %v434
      %v856 = vpop.f32.mrf.mxu0
      %v857 = vadd.f32 %v843, %v856
      %v858 = vpop.f32.mrf.mxu0
      %v859 = vadd.f32 %v845, %v858
      %860 = vdwg.mxu0
      %861 = vmatpush.bf16.msra.mxu0 %v728
      %862 = vmatpush.bf16.msra.mxu0 %v727
      %863 = vmatpush.bf16.msra.mxu0 %v726
      %864 = vmatpush.bf16.msra.mxu0 %v725
      %865 = vmatpush.bf16.msra.mxu0 %v724
      %866 = vmatpush.bf16.msra.mxu0 %v723
      %867 = vmatpush.bf16.msra.mxu0 %v722
      %868 = vmatpush.bf16.msra.mxu0 %v721
      %869 = vmatmul.bf16.gmra.mxu0 %v435
      %v870 = vpop.f32.mrf.mxu0
      %v871 = vadd.f32 %v857, %v870
      %v872 = vpop.f32.mrf.mxu0
      %v873 = vadd.f32 %v859, %v872
      %874 = vdwg.mxu0
      %875 = vmatpush.bf16.msra.mxu0 %v736
      %876 = vmatpush.bf16.msra.mxu0 %v735
      %877 = vmatpush.bf16.msra.mxu0 %v734
      %878 = vmatpush.bf16.msra.mxu0 %v733
      %879 = vmatpush.bf16.msra.mxu0 %v732
      %880 = vmatpush.bf16.msra.mxu0 %v731
      %881 = vmatpush.bf16.msra.mxu0 %v730
      %882 = vmatpush.bf16.msra.mxu0 %v729
      %883 = vmatmul.bf16.gmra.mxu0 %v436
      %v884 = vpop.f32.mrf.mxu0
      %v885 = vadd.f32 %v871, %v884
      %v886 = vpop.f32.mrf.mxu0
      %v887 = vadd.f32 %v873, %v886
      %888 = vdwg.mxu0
      %889 = vmatpush.bf16.msra.mxu0 %v744
      %890 = vmatpush.bf16.msra.mxu0 %v743
      %891 = vmatpush.bf16.msra.mxu0 %v742
      %892 = vmatpush.bf16.msra.mxu0 %v741
      %893 = vmatpush.bf16.msra.mxu0 %v740
      %894 = vmatpush.bf16.msra.mxu0 %v739
      %895 = vmatpush.bf16.msra.mxu0 %v738
      %896 = vmatpush.bf16.msra.mxu0 %v737
      %897 = vmatmul.bf16.gmra.mxu0 %v437
      %v898 = vpop.f32.mrf.mxu0
      %v899 = vadd.f32 %v885, %v898
      %v900 = vpop.f32.mrf.mxu0
      %v901 = vadd.f32 %v887, %v900
      %902 = vdwg.mxu0
      %903 = vmatpush.bf16.msra.mxu0 %v752
      %904 = vmatpush.bf16.msra.mxu0 %v751
      %905 = vmatpush.bf16.msra.mxu0 %v750
      %906 = vmatpush.bf16.msra.mxu0 %v749
      %907 = vmatpush.bf16.msra.mxu0 %v748
      %908 = vmatpush.bf16.msra.mxu0 %v747
      %909 = vmatpush.bf16.msra.mxu0 %v746
      %910 = vmatpush.bf16.msra.mxu0 %v745
      %911 = vmatmul.bf16.gmra.mxu0 %v438
      %v912 = vpop.f32.mrf.mxu0
      %v913 = vadd.f32 %v899, %v912
      %v914 = vpop.f32.mrf.mxu0
      %v915 = vadd.f32 %v901, %v914
      %916 = vdwg.mxu0
      %917 = vmatpush.bf16.msra.mxu0 %v760
      %918 = vmatpush.bf16.msra.mxu0 %v759
      %919 = vmatpush.bf16.msra.mxu0 %v758
      %920 = vmatpush.bf16.msra.mxu0 %v757
      %921 = vmatpush.bf16.msra.mxu0 %v756
      %922 = vmatpush.bf16.msra.mxu0 %v755
      %923 = vmatpush.bf16.msra.mxu0 %v754
      %924 = vmatpush.bf16.msra.mxu0 %v753
      %925 = vmatmul.bf16.gmra.mxu0 %v439
      %v926 = vpop.f32.mrf.mxu0
      %v927 = vadd.f32 %v913, %v926
      %v928 = vpop.f32.mrf.mxu0
      %v929 = vadd.f32 %v915, %v928
      %930 = vdwg.mxu0
      %931 = vmatpush.bf16.msra.mxu0 %v768
      %932 = vmatpush.bf16.msra.mxu0 %v767
      %933 = vmatpush.bf16.msra.mxu0 %v766
      %934 = vmatpush.bf16.msra.mxu0 %v765
      %935 = vmatpush.bf16.msra.mxu0 %v764
      %936 = vmatpush.bf16.msra.mxu0 %v763
      %937 = vmatpush.bf16.msra.mxu0 %v762
      %938 = vmatpush.bf16.msra.mxu0 %v761
      %939 = vmatmul.bf16.gmra.mxu0 %v440
      %v940 = vpop.f32.mrf.mxu0
      %v941 = vadd.f32 %v927, %v940
      %v942 = vpop.f32.mrf.mxu0
      %v943 = vadd.f32 %v929, %v942
      %944 = vdwg.mxu0
      %v945 = vadd.f32 %v271, %v941
      %v946 = vadd.f32 %v272, %v943
      %947 = vst [vmem:[#allocation2] sm:$0xff] %v945
      %948 = vst [vmem:[#allocation2 + $0x8] sm:$0xff] %v946
      // Predicated region
      $region37: #{mlp_probe_forward.3} parent=31 // pred_check
        %p949 = pneg %p265
      $region38: #{mlp_probe_forward.3} parent=31 // pred_check_branch
        %951 = sbr.rel (%p949) target = $region40
      $region39: #{mlp_probe_forward.3} parent=31 // pred_region
        %v952 = vld [vmem:[#allocation2] sm:$0xff]
        %v953 = vld [vmem:[#allocation2 + $0x8] sm:$0xff]
        %v954 = vpack.c.bf16 %v953, %v952
        %v955 = vld [vmem:[%s2] sm:$0xf]
        %v956 = vld [vmem:[%s2 + $0x4] sm:$0xf]
        %v957 = vld [vmem:[%s2 + $0x8] sm:$0xf]
        %v958 = vld [vmem:[%s2 + $0xc] sm:$0xf]
        %v959 = vld [vmem:[%s2 + $0x10] sm:$0xf]
        %v960 = vld [vmem:[%s2 + $0x14] sm:$0xf]
        %v961 = vld [vmem:[%s2 + $0x18] sm:$0xf]
        %v962 = vld [vmem:[%s2 + $0x1c] sm:$0xf]
        %v963 = vld [vmem:[%s2 + $0x20] sm:$0xf]
        %v964 = vld [vmem:[%s2 + $0x24] sm:$0xf]
        %v965 = vld [vmem:[%s2 + $0x28] sm:$0xf]
        %v966 = vld [vmem:[%s2 + $0x2c] sm:$0xf]
        %v967 = vld [vmem:[%s2 + $0x30] sm:$0xf]
        %v968 = vld [vmem:[%s2 + $0x34] sm:$0xf]
        %v969 = vld [vmem:[%s2 + $0x38] sm:$0xf]
        %v970 = vld [vmem:[%s2 + $0x3c] sm:$0xf]
        %v987 = vunpack.c.l.b16 %v955
        %v988 = vunpack.c.l.b16 %v956
        %v989 = vunpack.c.l.b16 %v957
        %v990 = vunpack.c.l.b16 %v958
        %v991 = vunpack.c.l.b16 %v959
        %v992 = vunpack.c.l.b16 %v960
        %v993 = vunpack.c.l.b16 %v961
        %v994 = vunpack.c.l.b16 %v962
        %v995 = vunpack.c.l.b16 %v963
        %v996 = vunpack.c.l.b16 %v964
        %v997 = vunpack.c.l.b16 %v965
        %v998 = vunpack.c.l.b16 %v966
        %v999 = vunpack.c.l.b16 %v967
        %v1000 = vunpack.c.l.b16 %v968
        %v1001 = vunpack.c.l.b16 %v969
        %v1002 = vunpack.c.l.b16 %v970
        %v1003 = vpack.c.b16 %v988, %v987
        %v1004 = vpack.c.b16 %v990, %v989
        %v1005 = vpack.c.b16 %v992, %v991
        %v1006 = vpack.c.b16 %v994, %v993
        %v1007 = vpack.c.b16 %v996, %v995
        %v1008 = vpack.c.b16 %v998, %v997
        %v1009 = vpack.c.b16 %v1000, %v999
        %v1010 = vpack.c.b16 %v1002, %v1001
        %1019 = vmatpush.bf16.msra.mxu0 %v1010
        %1020 = vmatpush.bf16.msra.mxu0 %v1009
        %1021 = vmatpush.bf16.msra.mxu0 %v1008
        %1022 = vmatpush.bf16.msra.mxu0 %v1007
        %1023 = vmatpush.bf16.msra.mxu0 %v1006
        %1024 = vmatpush.bf16.msra.mxu0 %v1005
        %1025 = vmatpush.bf16.msra.mxu0 %v1004
        %1026 = vmatpush.bf16.msra.mxu0 %v1003
        %1027 = vmatmul.bf16.gmra.mxu0 %v954
        %v1028 = vpop.f32.mrf.mxu0
        %v1029 = vadd.f32 0.0, %v1028
        %v1030 = vpop.f32.mrf.mxu0
        %v1031 = vadd.f32 0.0, %v1030
        %1032 = vdwg.mxu0
        %v1033 = vpack.c.bf16 %v1029, %v1029
        %v1034 = vpack.c.bf16 %v1031, %v1031
        %1035 = vst [vmem:[%s259] sm:$0xf] %v1033
        %1036 = vst [vmem:[%s259 + $0x4] sm:$0xf] %v1034
        %v1037 = vadd.f32 %v1029, %v1031
        %v1038 = vrot.slane %v1037, 4
        %v1039 = vadd.f32 %v1037, %v1038
        %v1040 = vrot.slane %v1039, 2
        %v1041 = vadd.f32 %v1039, %v1040
        %v1042 = vrot.slane %v1041, 1
        %v1043 = vadd.f32 %v1041, %v1042
        %v1044 = vmul.f32 %v1029, %v1029
        %v1045 = vmul.f32 %v1031, %v1031
        %v1046 = vadd.f32 %v1044, %v1045
        %v1047 = vrot.slane %v1046, 4
        %v1048 = vadd.f32 %v1046, %v1047
        %v1049 = vrot.slane %v1048, 2
        %v1050 = vadd.f32 %v1048, %v1049
        %v1051 = vrot.slane %v1050, 1
        %v1052 = vadd.f32 %v1050, %v1051
        %vm1053 = vcmask 1040384
        %v1054 = vsel %vm1053, %v1043, %v1052
        %1055 = vst [vmem:[%s264] sm:$0x3] %v1054
      $region40: #{mlp_probe_forward.3} parent=31 // pred_fallthru
        _
      %s1056 = smul.u32 2, %s20
      %p1057 = scmp.lt.s32.totalorder %s1056, 3
      %s1058 = scalar_select %p1057, %s1056, 3
      %s1059 = smul.addr %s1058, 4
      %s1060 = scalar_lea.vmem %s3, %s1059
      %p1061 = scmp.lt.s32.totalorder %s20, 1
      %s1062 = scalar_select %p1061, %s20, 1
      %s1063 = smul.addr %s1062, 2
      %s1064 = scalar_lea.vmem %s4, %s1063
      // Predicated region
      $region41: #{mlp_probe_forward.3} parent=31 // pred_check
        %p1065 = pneg %p121
      $region42: #{mlp_probe_forward.3} parent=31 // pred_check_branch
        %1067 = sbr.rel (%p1065) target = $region44
      $region43: #{mlp_probe_forward.3} parent=31 // pred_region
        %s1068 = smul.u32 2, %s20
      $region44: #{mlp_probe_forward.3} parent=31 // pred_fallthru
        _
      // Predicated region
      $region45: #{mlp_probe_forward.3} parent=31 // pred_check
        %p1069 = pneg %p147
      $region46: #{mlp_probe_forward.3} parent=31 // pred_check_branch
        %1071 = sbr.rel (%p1069) target = $region48
      $region47: #{mlp_probe_forward.3} parent=31 // pred_region
        _
      $region48: #{mlp_probe_forward.3} parent=31 // pred_fallthru
        _
    $region32: #{mlp_probe_forward.3} parent=5 // pred_fallthru
      _
    %p1072 = scmp.le.s32.totalorder 2, %s11
    // Predicated region
    $region49: #{mlp_probe_forward.3} parent=5 // pred_check
      %p1073 = pneg %p1072
    $region50: #{mlp_probe_forward.3} parent=5 // pred_check_branch
      %1075 = sbr.rel (%p1073) target = $region52
    $region51: #{mlp_probe_forward.3} parent=5 // pred_region
      %s1076 = ssub.s32 %s11, 2
      // Predicated region
      $region53: #{mlp_probe_forward.3} parent=51 // pred_check
        %p1077 = pneg %p127
      $region54: #{mlp_probe_forward.3} parent=51 // pred_check_branch
        %1079 = sbr.rel (%p1077) target = $region56
      $region55: #{mlp_probe_forward.3} parent=51 // pred_region
        %s1080 = smul.u32 2, %s22
        %p1081 = scmp.lt.s32.totalorder %s1080, 3
        %s1082 = scalar_select %p1081, %s1080, 3
        %s1083 = smul.addr %s1082, 4
        %s1084 = scalar_lea.vmem %s3, %s1083
      $region56: #{mlp_probe_forward.3} parent=51 // pred_fallthru
        _
      // Predicated region
      $region57: #{mlp_probe_forward.3} parent=51 // pred_check
        %p1085 = pneg %p153
      $region58: #{mlp_probe_forward.3} parent=51 // pred_check_branch
        %1087 = sbr.rel (%p1085) target = $region60
      $region59: #{mlp_probe_forward.3} parent=51 // pred_region
        %p1088 = scmp.lt.s32.totalorder %s22, 1
        %s1089 = scalar_select %p1088, %s22, 1
        %s1090 = smul.addr %s1089, 2
        %s1091 = scalar_lea.vmem %s4, %s1090
      $region60: #{mlp_probe_forward.3} parent=51 // pred_fallthru
        _
    $region52: #{mlp_probe_forward.3} parent=5 // pred_fallthru
      _
  $region6: #{mlp_probe_forward.3} parent=0 // loop_footer
    %s15 = sadd.s32 1, %s11
  $region7: #{mlp_probe_forward.3} parent=0 // loop_footer_branch
    %10 = sbr.rel target = $region3
  $region8: #{mlp_probe_forward.3} parent=0 // loop_exit
    _

</llo_original>
